<compile_context>
chip_gen: v7x
topology: tpu7x:2x2x1
jax: 0.10.0
libtpu: 0.0.40
codegen_flags: <defaults>
</compile_context>

<pallas_src>
from functools import partial

import jax
import jax.numpy as jnp
from jax.experimental import pallas as pl
from jax.experimental.pallas import tpu as pltpu


# --------------------------------------------------------------------------- kernel
def qnetwork_kernel(x_ref, w1_ref, b1_ref, w2_ref, b2_ref, w3_ref, b3_ref,
                    w4_ref, b4_ref, o_ref, *, bf16_epilogue):
    bf = jnp.bfloat16

    def act(acc_f32, b_ref):
        # acc_f32: [H, TM] f32 MXU accumulator.
        if bf16_epilogue:
            # v6e/v7x: bf16 VALU -> halve VPU vreg traffic, feed next dot directly.
            return jnp.maximum(acc_f32.astype(bf) + b_ref[...].astype(bf), 0)
        # v5e / fallback: f32 elementwise path.
        return jnp.maximum(acc_f32 + b_ref[...], 0.0)

    # ---- Layer 1: Linear(state_dim+action_dim -> H) + ReLU (concat done in wrapper)
    h = act(jnp.dot(w1_ref[...], x_ref[...], preferred_element_type=jnp.float32),
            b1_ref)
    # ---- Layer 2: Linear(H -> H) + ReLU
    h = act(jnp.dot(w2_ref[...], h.astype(bf), preferred_element_type=jnp.float32),
            b2_ref)
    # ---- Layer 3: Linear(H -> H) + ReLU
    h = act(jnp.dot(w3_ref[...], h.astype(bf), preferred_element_type=jnp.float32),
            b3_ref)
    # ---- Head: Linear(H -> 1) off the MXU: VPU broadcast-mul + XLU sublane reduce.
    q = jnp.sum(h.astype(jnp.float32) * w4_ref[...], axis=0, keepdims=True) + b4_ref[0, 0]
    o_ref[...] = q.astype(o_ref.dtype)


# --------------------------------------------------------------------------- tiling
def _round_up(x, m):
    return ((x + m - 1) // m) * m


def _choose_batch_tile(batch, tile_b):
    """Pick a lane-dense batch tile (multiple of 128) and the tile count.

    Small batches pad up to one dense 128-lane tile. Larger batches aim for >= 2
    tiles with an even count so the ("parallel",) grid axis balances across both
    v7x TensorCores; harmless on single-TC v5e/v6e.
    """
    tile_b = max(128, _round_up(tile_b, 128))
    bp = _round_up(batch, 128)
    tm = min(tile_b, max(128, _round_up(-(-bp // 2), 128)))
    n = -(-bp // tm)
    if n > 1 and n % 2 == 1:
        n_even = n + 1
        tm = max(128, _round_up(-(-bp // n_even), 128))
        n = -(-bp // tm)
    return tm, n


# --------------------------------------------------------------------------- wrapper
@partial(jax.jit, static_argnames=("tile_b", "bf16_epilogue"))
def qnetwork_forward(state, action, params, *, tile_b=2048, bf16_epilogue=False):
    """state: [B, state_dim], action: [B, action_dim] -> q: [B, 1] (float32)."""
    w1, b1, w2, b2, w3, b3, w4, b4 = params
    B, sd = state.shape
    ad = action.shape[1]
    in_dim = sd + ad
    H = w2.shape[0]
    assert w1.shape == (H, in_dim)

    TM, n_tiles = _choose_batch_tile(B, tile_b)
    Bp = n_tiles * TM

    # Per-call prep (fused under jit): concat, cast to bf16, pad batch, transpose
    # so the batch sits on the lane axis: [B, in_dim] -> [in_dim, Bp].
    x = jnp.concatenate([state, action], axis=1).astype(jnp.bfloat16)
    if Bp != B:
        x = jnp.pad(x, ((0, Bp - B), (0, 0)))
    xT = x.T

    const = lambda i: (0, 0)   # weights/biases: VMEM-resident, no re-DMA per step
    in_specs = [
        pl.BlockSpec((in_dim, TM), lambda i: (0, i)),       # x^T batch tile
        pl.BlockSpec((H, in_dim), const),                   # W1
        pl.BlockSpec((H, 1), const),                        # b1 (column)
        pl.BlockSpec((H, H), const),                        # W2
        pl.BlockSpec((H, 1), const),                        # b2
        pl.BlockSpec((H, H), const),                        # W3
        pl.BlockSpec((H, 1), const),                        # b3
        pl.BlockSpec((H, 1), const),                        # w4 (column, f32)
        pl.BlockSpec(memory_space=pltpu.MemorySpace.SMEM),  # b4 scalar in SMEM
    ]

    out = pl.pallas_call(
        partial(qnetwork_kernel, bf16_epilogue=bf16_epilogue),
        out_shape=jax.ShapeDtypeStruct((1, Bp), jnp.float32),
        grid=(n_tiles,),
        in_specs=in_specs,
        out_specs=pl.BlockSpec((1, TM), lambda i: (0, i)),   # lane-dense output slab
        compiler_params=pltpu.CompilerParams(
            dimension_semantics=("parallel",),               # megacore / dual-TC shard
            vmem_limit_bytes=32 * 1024 * 1024),
    )(xT, w1, b1, w2, b2, w3, b3, w4, b4)

    return out[0, :B].reshape(B, 1)


# --------------------------------------------------------------------------- params
def init_params(key, state_dim, action_dim, hidden_dim):
    """PyTorch-style init (uniform +/- 1/sqrt(fan_in)); weights in [out, in] layout."""
    def linear(key, fan_in, fan_out):
        kw, kb = jax.random.split(key)
        bound = 1.0 / jnp.sqrt(jnp.float32(fan_in))
        w = jax.random.uniform(kw, (fan_out, fan_in), jnp.float32, -bound, bound)
        b = jax.random.uniform(kb, (fan_out,), jnp.float32, -bound, bound)
        return w, b

    k1, k2, k3, k4 = jax.random.split(key, 4)
    in_dim = state_dim + action_dim
    w1, b1 = linear(k1, in_dim, hidden_dim)
    w2, b2 = linear(k2, hidden_dim, hidden_dim)
    w3, b3 = linear(k3, hidden_dim, hidden_dim)
    w4, b4 = linear(k4, hidden_dim, 1)
    return (w1, b1, w2, b2, w3, b3, w4, b4)


def prepare_params(params):
    """One-time weight prep (hoisted out of the per-call path): bf16 weight casts,
    biases as f32 columns, head weight as an f32 column, b4 as a [1,1] SMEM scalar."""
    w1, b1, w2, b2, w3, b3, w4, b4 = params
    bf = jnp.bfloat16
    return (w1.astype(bf), b1.reshape(-1, 1),
            w2.astype(bf), b2.reshape(-1, 1),
            w3.astype(bf), b3.reshape(-1, 1),
            w4.T.astype(jnp.float32),          # [H, 1]
            b4.reshape(1, 1).astype(jnp.float32))


def default_bf16_epilogue():
    """bf16 bias+ReLU epilogue only where the VPU has a bf16 datapath (v6e / v7x)."""
    try:
        kind = jax.devices()[0].device_kind.lower()
    except Exception:
        return False
    return ("v6" in kind) or ("v7" in kind)


# --------------------------------------------------------------------------- reference
def reference_forward(state, action, params, *, bf16_epilogue=False):
    """Pure-JAX reference with the same bf16-input / f32-accumulate numerics."""
    w1, b1, w2, b2, w3, b3, w4, b4 = params
    bf = jnp.bfloat16

    def act(acc, b):
        if bf16_epilogue:
            return jnp.maximum(acc.astype(bf) + b.astype(bf), 0)
        return jnp.maximum(acc + b, 0.0)

    x = jnp.concatenate([state, action], axis=1).astype(bf).T        # [in, B]
    h = act(jnp.dot(w1.astype(bf), x, preferred_element_type=jnp.float32), b1)
    h = act(jnp.dot(w2.astype(bf), h.astype(bf), preferred_element_type=jnp.float32), b2)
    h = act(jnp.dot(w3.astype(bf), h.astype(bf), preferred_element_type=jnp.float32), b3)
    q = jnp.sum(h.astype(jnp.float32) * w4, axis=0, keepdims=True) + b4[0, 0]
    return q.T                                                       # [B, 1]


# --------------------------------------------------------------------------- main
if __name__ == "__main__":
    state_dim = 12
    action_dim = 4
    hidden_dim = 256   # module default

    key = jax.random.PRNGKey(0)
    k_params, k_state, k_action, k_state2, k_action2 = jax.random.split(key, 5)

    raw_params = init_params(k_params, state_dim, action_dim, hidden_dim)
    params = prepare_params(raw_params)
    use_bf16_ep = default_bf16_epilogue()

    # Small-batch check (exercises the dense 128-lane pad path).
    batch = 8
    state = jax.random.normal(k_state, (batch, state_dim), jnp.float32)
    action = jax.random.normal(k_action, (batch, action_dim), jnp.float32)
    q = jax.block_until_ready(
        qnetwork_forward(state, action, params, tile_b=2048, bf16_epilogue=use_bf16_ep))
    q_ref = reference_forward(state, action, params, bf16_epilogue=use_bf16_ep)
    assert q.shape == (batch, 1), q.shape
    err = jnp.max(jnp.abs(q - q_ref))
    assert jnp.allclose(q, q_ref, atol=2e-3, rtol=2e-3), f"mismatch: max abs err {err}"

    # Multi-tile check (exercises batch padding + even 2-tile grid split).
    batch2 = 384
    state2 = jax.random.normal(k_state2, (batch2, state_dim), jnp.float32)
    action2 = jax.random.normal(k_action2, (batch2, action_dim), jnp.float32)
    q2 = jax.block_until_ready(
        qnetwork_forward(state2, action2, params, tile_b=2048, bf16_epilogue=use_bf16_ep))
    q2_ref = reference_forward(state2, action2, params, bf16_epilogue=use_bf16_ep)
    assert q2.shape == (batch2, 1), q2.shape
    err2 = jnp.max(jnp.abs(q2 - q2_ref))
    assert jnp.allclose(q2, q2_ref, atol=2e-3, rtol=2e-3), f"mismatch: max abs err {err2}"

    print("KERNEL_OK")
</pallas_src>

<mosaic_0001>
module attributes {stable_mosaic.version = 11 : i64} {
  func.func @qnetwork_kernel(%arg0: i32, %arg1: memref<16x128xbf16, #tpu.memory_space<vmem>>, %arg2: memref<256x16xbf16, #tpu.memory_space<vmem>>, %arg3: memref<256x1xf32, #tpu.memory_space<vmem>>, %arg4: memref<256x256xbf16, #tpu.memory_space<vmem>>, %arg5: memref<256x1xf32, #tpu.memory_space<vmem>>, %arg6: memref<256x256xbf16, #tpu.memory_space<vmem>>, %arg7: memref<256x1xf32, #tpu.memory_space<vmem>>, %arg8: memref<256x1xf32, #tpu.memory_space<vmem>>, %arg9: memref<1x1xf32, #tpu.memory_space<smem>>, %arg10: memref<1x128xf32, #tpu.memory_space<vmem>>) attributes {dimension_semantics = [#tpu.dimension_semantics<parallel>], iteration_bounds = array<i64: 1>, scalar_prefetch = 0 : i64, scratch_operands = 0 : i64, tpu.core_type = #tpu.core_type<tc>, window_params = [{transform_indices = @transform_0, window_bounds = array<i64: 16, 128>}, {pipeline_mode = #tpu.pipeline_mode<synchronous>, transform_indices = @transform_1, window_bounds = array<i64: 256, 16>}, {pipeline_mode = #tpu.pipeline_mode<synchronous>, transform_indices = @transform_2, window_bounds = array<i64: 256, 1>}, {pipeline_mode = #tpu.pipeline_mode<synchronous>, transform_indices = @transform_3, window_bounds = array<i64: 256, 256>}, {pipeline_mode = #tpu.pipeline_mode<synchronous>, transform_indices = @transform_4, window_bounds = array<i64: 256, 1>}, {pipeline_mode = #tpu.pipeline_mode<synchronous>, transform_indices = @transform_5, window_bounds = array<i64: 256, 256>}, {pipeline_mode = #tpu.pipeline_mode<synchronous>, transform_indices = @transform_6, window_bounds = array<i64: 256, 1>}, {pipeline_mode = #tpu.pipeline_mode<synchronous>, transform_indices = @transform_7, window_bounds = array<i64: 256, 1>}, {transform_indices = @transform_8, window_bounds = array<i64: 1, 1>}, {transform_indices = @transform_9, window_bounds = array<i64: 1, 128>}]} {
    %c0 = arith.constant 0 : index
    %c0_0 = arith.constant 0 : index
    %0 = vector.load %arg2[%c0, %c0_0] : memref<256x16xbf16, #tpu.memory_space<vmem>>, vector<256x16xbf16>
    %c0_1 = arith.constant 0 : index
    %c0_2 = arith.constant 0 : index
    %1 = vector.load %arg1[%c0_1, %c0_2] : memref<16x128xbf16, #tpu.memory_space<vmem>>, vector<16x128xbf16>
    %cst = arith.constant dense<0.000000e+00> : vector<256x128xf32>
    %2 = tpu.matmul %0, %1, %cst {dimension_numbers = #tpu.dot_dimension_numbers<[1], [0], [0], [1], [0, 0, 1, 1], [], []>} : vector<256x16xbf16>, vector<16x128xbf16>, vector<256x128xf32> -> vector<256x128xf32>
    %c0_3 = arith.constant 0 : index
    %c0_4 = arith.constant 0 : index
    %3 = vector.load %arg3[%c0_3, %c0_4] : memref<256x1xf32, #tpu.memory_space<vmem>>, vector<256x1xf32>
    %4 = vector.broadcast %3 : vector<256x1xf32> to vector<256x128xf32>
    %5 = arith.addf %2, %4 : vector<256x128xf32>
    %cst_5 = arith.constant 0.000000e+00 : f32
    %6 = vector.broadcast %cst_5 : f32 to vector<256x128xf32>
    %7 = arith.maximumf %5, %6 : vector<256x128xf32>
    %c0_6 = arith.constant 0 : index
    %c0_7 = arith.constant 0 : index
    %8 = vector.load %arg4[%c0_6, %c0_7] : memref<256x256xbf16, #tpu.memory_space<vmem>>, vector<256x256xbf16>
    %9 = arith.truncf %7 : vector<256x128xf32> to vector<256x128xbf16>
    %cst_8 = arith.constant dense<0.000000e+00> : vector<256x128xf32>
    %10 = tpu.matmul %8, %9, %cst_8 {dimension_numbers = #tpu.dot_dimension_numbers<[1], [0], [0], [1], [0, 0, 1, 1], [], []>} : vector<256x256xbf16>, vector<256x128xbf16>, vector<256x128xf32> -> vector<256x128xf32>
    %c0_9 = arith.constant 0 : index
    %c0_10 = arith.constant 0 : index
    %11 = vector.load %arg5[%c0_9, %c0_10] : memref<256x1xf32, #tpu.memory_space<vmem>>, vector<256x1xf32>
    %12 = vector.broadcast %11 : vector<256x1xf32> to vector<256x128xf32>
    %13 = arith.addf %10, %12 : vector<256x128xf32>
    %cst_11 = arith.constant 0.000000e+00 : f32
    %14 = vector.broadcast %cst_11 : f32 to vector<256x128xf32>
    %15 = arith.maximumf %13, %14 : vector<256x128xf32>
    %c0_12 = arith.constant 0 : index
    %c0_13 = arith.constant 0 : index
    %16 = vector.load %arg6[%c0_12, %c0_13] : memref<256x256xbf16, #tpu.memory_space<vmem>>, vector<256x256xbf16>
    %17 = arith.truncf %15 : vector<256x128xf32> to vector<256x128xbf16>
    %cst_14 = arith.constant dense<0.000000e+00> : vector<256x128xf32>
    %18 = tpu.matmul %16, %17, %cst_14 {dimension_numbers = #tpu.dot_dimension_numbers<[1], [0], [0], [1], [0, 0, 1, 1], [], []>} : vector<256x256xbf16>, vector<256x128xbf16>, vector<256x128xf32> -> vector<256x128xf32>
    %c0_15 = arith.constant 0 : index
    %c0_16 = arith.constant 0 : index
    %19 = vector.load %arg7[%c0_15, %c0_16] : memref<256x1xf32, #tpu.memory_space<vmem>>, vector<256x1xf32>
    %20 = vector.broadcast %19 : vector<256x1xf32> to vector<256x128xf32>
    %21 = arith.addf %18, %20 : vector<256x128xf32>
    %cst_17 = arith.constant 0.000000e+00 : f32
    %22 = vector.broadcast %cst_17 : f32 to vector<256x128xf32>
    %23 = arith.maximumf %21, %22 : vector<256x128xf32>
    %c0_18 = arith.constant 0 : index
    %c0_19 = arith.constant 0 : index
    %24 = vector.load %arg8[%c0_18, %c0_19] : memref<256x1xf32, #tpu.memory_space<vmem>>, vector<256x1xf32>
    %25 = vector.broadcast %24 : vector<256x1xf32> to vector<256x128xf32>
    %26 = arith.mulf %23, %25 : vector<256x128xf32>
    %cst_20 = arith.constant dense<0.000000e+00> : vector<128xf32>
    %27 = vector.multi_reduction <add>, %26, %cst_20 [0] : vector<256x128xf32> to vector<128xf32>
    %28 = vector.shape_cast %27 : vector<128xf32> to vector<1x128xf32>
    %c0_21 = arith.constant 0 : index
    %c0_22 = arith.constant 0 : index
    %29 = memref.load %arg9[%c0_21, %c0_22] : memref<1x1xf32, #tpu.memory_space<smem>>
    %30 = vector.broadcast %29 : f32 to vector<1x128xf32>
    %31 = arith.addf %28, %30 : vector<1x128xf32>
    %c0_23 = arith.constant 0 : index
    %c0_24 = arith.constant 0 : index
    %32 = vector.load %arg10[%c0_23, %c0_24] : memref<1x128xf32, #tpu.memory_space<vmem>>, vector<1x128xf32>
    tpu.vector_store %arg10[%c0_23, %c0_24], %31 {strides = array<i32>} : memref<1x128xf32, #tpu.memory_space<vmem>>, vector<1x128xf32>,
    return
  }
  func.func @transform_0(%arg0: i32) -> (i32, i32) {
    %c0_i32 = arith.constant 0 : i32
    %c0_i32_0 = arith.constant 0 : i32
    return %c0_i32, %arg0 : i32, i32
  }
  func.func @transform_1(%arg0: i32) -> (i32, i32) {
    %c0_i32 = arith.constant 0 : i32
    %c0_i32_0 = arith.constant 0 : i32
    %c0_i32_1 = arith.constant 0 : i32
    return %c0_i32, %c0_i32_0 : i32, i32
  }
  func.func @transform_2(%arg0: i32) -> (i32, i32) {
    %c0_i32 = arith.constant 0 : i32
    %c0_i32_0 = arith.constant 0 : i32
    %c0_i32_1 = arith.constant 0 : i32
    return %c0_i32, %c0_i32_0 : i32, i32
  }
  func.func @transform_3(%arg0: i32) -> (i32, i32) {
    %c0_i32 = arith.constant 0 : i32
    %c0_i32_0 = arith.constant 0 : i32
    %c0_i32_1 = arith.constant 0 : i32
    return %c0_i32, %c0_i32_0 : i32, i32
  }
  func.func @transform_4(%arg0: i32) -> (i32, i32) {
    %c0_i32 = arith.constant 0 : i32
    %c0_i32_0 = arith.constant 0 : i32
    %c0_i32_1 = arith.constant 0 : i32
    return %c0_i32, %c0_i32_0 : i32, i32
  }
  func.func @transform_5(%arg0: i32) -> (i32, i32) {
    %c0_i32 = arith.constant 0 : i32
    %c0_i32_0 = arith.constant 0 : i32
    %c0_i32_1 = arith.constant 0 : i32
    return %c0_i32, %c0_i32_0 : i32, i32
  }
  func.func @transform_6(%arg0: i32) -> (i32, i32) {
    %c0_i32 = arith.constant 0 : i32
    %c0_i32_0 = arith.constant 0 : i32
    %c0_i32_1 = arith.constant 0 : i32
    return %c0_i32, %c0_i32_0 : i32, i32
  }
  func.func @transform_7(%arg0: i32) -> (i32, i32) {
    %c0_i32 = arith.constant 0 : i32
    %c0_i32_0 = arith.constant 0 : i32
    %c0_i32_1 = arith.constant 0 : i32
    return %c0_i32, %c0_i32_0 : i32, i32
  }
  func.func @transform_8(%arg0: i32) -> (i32, i32) {
    %c0_i32 = arith.constant 0 : i32
    %c0_i32_0 = arith.constant 0 : i32
    %c0_i32_1 = arith.constant 0 : i32
    return %c0_i32, %c0_i32_0 : i32, i32
  }
  func.func @transform_9(%arg0: i32) -> (i32, i32) {
    %c0_i32 = arith.constant 0 : i32
    %c0_i32_0 = arith.constant 0 : i32
    return %c0_i32, %arg0 : i32, i32
  }
}

</mosaic_0001>

<llo_original>
// kernel: qnetwork_forward.1
$region0: #{qnetwork_forward.1}
  #allocation0 [shape = 'u32[]', space=smem, size = 0x4, offset = 0x4, fixed_abs, tag = 'smem constant byte address 0x4 - core index']
  #allocation1 [shape = 'u32[144,128]{1,0:T(1,128)}', space=vmem, size = 0x12000, scoped, tag = 'internal scratch']
  #allocation2 [shape = 'f32[1,1]{1,0:T(1,128)S(6)}', space=smem, size = 0x200, scoped, tag = 'scoped memory for qnetwork_forward.1']
  %s0 = inlined_call_operand.vmem [shape: bf16[16,128], index: 0, kind: input, shape index: {}]
  %s1 = inlined_call_operand.vmem [shape: bf16[256,16], index: 1, kind: input, shape index: {}]
  %s2 = inlined_call_operand.vmem [shape: f32[256,1], index: 2, kind: input, shape index: {}]
  %s3 = inlined_call_operand.vmem [shape: bf16[256,256], index: 3, kind: input, shape index: {}]
  %s4 = inlined_call_operand.vmem [shape: f32[256,1], index: 4, kind: input, shape index: {}]
  %s5 = inlined_call_operand.vmem [shape: bf16[256,256], index: 5, kind: input, shape index: {}]
  %s6 = inlined_call_operand.vmem [shape: f32[256,1], index: 6, kind: input, shape index: {}]
  %s7 = inlined_call_operand.vmem [shape: f32[256,1], index: 7, kind: input, shape index: {}]
  %s8 = inlined_call_operand.<no memory space> [shape: f32[1,1], index: 8, kind: input, shape index: {}]
  %s9 = inlined_call_operand.vmem [shape: f32[1,128], index: 9, kind: output, shape index: {}]
  %s10 = sld [smem:[#allocation0]]
  $region46: #{qnetwork_forward.1} parent=0
    _
  %s12 = ssub.s32 1, %s10
  %s13 = scalar_select 0, %s12, %s10
  %14 = sst [smem:[#allocation2]] %s8
  // Predicated region
  $region2: #{qnetwork_forward.1} parent=0 // pred_check
    _
  $region3: #{qnetwork_forward.1} parent=0 // pred_check_branch
    %16 = sbr.rel (0) target = $region5
  $region4: #{qnetwork_forward.1} parent=0 // pred_region
    _
  $region5: #{qnetwork_forward.1} parent=0 // pred_fallthru
    _
  // Predicated region
  $region6: #{qnetwork_forward.1} parent=0 // pred_check
    _
  $region7: #{qnetwork_forward.1} parent=0 // pred_check_branch
    %18 = sbr.rel (0) target = $region9
  $region8: #{qnetwork_forward.1} parent=0 // pred_region
    _
  $region9: #{qnetwork_forward.1} parent=0 // pred_fallthru
    _
  // Predicated region
  $region10: #{qnetwork_forward.1} parent=0 // pred_check
    _
  $region11: #{qnetwork_forward.1} parent=0 // pred_check_branch
    %20 = sbr.rel (0) target = $region13
  $region12: #{qnetwork_forward.1} parent=0 // pred_region
    _
  $region13: #{qnetwork_forward.1} parent=0 // pred_fallthru
    _
  // Predicated region
  $region14: #{qnetwork_forward.1} parent=0 // pred_check
    _
  $region15: #{qnetwork_forward.1} parent=0 // pred_check_branch
    %22 = sbr.rel (0) target = $region17
  $region16: #{qnetwork_forward.1} parent=0 // pred_region
    _
  $region17: #{qnetwork_forward.1} parent=0 // pred_fallthru
    _
  // Predicated region
  $region18: #{qnetwork_forward.1} parent=0 // pred_check
    _
  $region19: #{qnetwork_forward.1} parent=0 // pred_check_branch
    %24 = sbr.rel (0) target = $region21
  $region20: #{qnetwork_forward.1} parent=0 // pred_region
    _
  $region21: #{qnetwork_forward.1} parent=0 // pred_fallthru
    _
  // Predicated region
  $region22: #{qnetwork_forward.1} parent=0 // pred_check
    _
  $region23: #{qnetwork_forward.1} parent=0 // pred_check_branch
    %26 = sbr.rel (0) target = $region25
  $region24: #{qnetwork_forward.1} parent=0 // pred_region
    _
  $region25: #{qnetwork_forward.1} parent=0 // pred_fallthru
    _
  // Predicated region
  $region26: #{qnetwork_forward.1} parent=0 // pred_check
    _
  $region27: #{qnetwork_forward.1} parent=0 // pred_check_branch
    %28 = sbr.rel (0) target = $region29
  $region28: #{qnetwork_forward.1} parent=0 // pred_region
    _
  $region29: #{qnetwork_forward.1} parent=0 // pred_fallthru
    _
  // Predicated region
  $region30: #{qnetwork_forward.1} parent=0 // pred_check
    _
  $region31: #{qnetwork_forward.1} parent=0 // pred_check_branch
    %30 = sbr.rel (0) target = $region33
  $region32: #{qnetwork_forward.1} parent=0 // pred_region
    _
  $region33: #{qnetwork_forward.1} parent=0 // pred_fallthru
    _
  // Predicated region
  $region34: #{qnetwork_forward.1} parent=0 // pred_check
    _
  $region35: #{qnetwork_forward.1} parent=0 // pred_check_branch
    %32 = sbr.rel (0) target = $region37
  $region36: #{qnetwork_forward.1} parent=0 // pred_region
    _
  $region37: #{qnetwork_forward.1} parent=0 // pred_fallthru
    _
  %v34 = vld [vmem:[%s1] sm:$0xf]
  %v35 = vld [vmem:[%s1 + $0x4] sm:$0xf]
  %v36 = vld [vmem:[%s1 + $0x8] sm:$0xf]
  %v37 = vld [vmem:[%s1 + $0xc] sm:$0xf]
  %v38 = vld [vmem:[%s1 + $0x10] sm:$0xf]
  %v39 = vld [vmem:[%s1 + $0x14] sm:$0xf]
  %v40 = vld [vmem:[%s1 + $0x18] sm:$0xf]
  %v41 = vld [vmem:[%s1 + $0x1c] sm:$0xf]
  %v42 = vld [vmem:[%s1 + $0x20] sm:$0xf]
  %v43 = vld [vmem:[%s1 + $0x24] sm:$0xf]
  %v44 = vld [vmem:[%s1 + $0x28] sm:$0xf]
  %v45 = vld [vmem:[%s1 + $0x2c] sm:$0xf]
  %v46 = vld [vmem:[%s1 + $0x30] sm:$0xf]
  %v47 = vld [vmem:[%s1 + $0x34] sm:$0xf]
  %v48 = vld [vmem:[%s1 + $0x38] sm:$0xf]
  %v49 = vld [vmem:[%s1 + $0x3c] sm:$0xf]
  %v50 = vld [vmem:[%s1 + $0x40] sm:$0xf]
  %v51 = vld [vmem:[%s1 + $0x44] sm:$0xf]
  %v52 = vld [vmem:[%s1 + $0x48] sm:$0xf]
  %v53 = vld [vmem:[%s1 + $0x4c] sm:$0xf]
  %v54 = vld [vmem:[%s1 + $0x50] sm:$0xf]
  %v55 = vld [vmem:[%s1 + $0x54] sm:$0xf]
  %v56 = vld [vmem:[%s1 + $0x58] sm:$0xf]
  %v57 = vld [vmem:[%s1 + $0x5c] sm:$0xf]
  %v58 = vld [vmem:[%s1 + $0x60] sm:$0xf]
  %v59 = vld [vmem:[%s1 + $0x64] sm:$0xf]
  %v60 = vld [vmem:[%s1 + $0x68] sm:$0xf]
  %v61 = vld [vmem:[%s1 + $0x6c] sm:$0xf]
  %v62 = vld [vmem:[%s1 + $0x70] sm:$0xf]
  %v63 = vld [vmem:[%s1 + $0x74] sm:$0xf]
  %v64 = vld [vmem:[%s1 + $0x78] sm:$0xf]
  %v65 = vld [vmem:[%s1 + $0x7c] sm:$0xf]
  %v66 = vld [vmem:[%s0] sm:$0xf]
  %v67 = vld [vmem:[%s0 + $0x4] sm:$0xf]
  %v68 = vld [vmem:[%s2] sm:$0xff]
  %v69 = vld [vmem:[%s2 + $0x8] sm:$0xff]
  %v70 = vld [vmem:[%s2 + $0x10] sm:$0xff]
  %v71 = vld [vmem:[%s2 + $0x18] sm:$0xff]
  %v72 = vld [vmem:[%s2 + $0x20] sm:$0xff]
  %v73 = vld [vmem:[%s2 + $0x28] sm:$0xff]
  %v74 = vld [vmem:[%s2 + $0x30] sm:$0xff]
  %v75 = vld [vmem:[%s2 + $0x38] sm:$0xff]
  %v76 = vld [vmem:[%s2 + $0x40] sm:$0xff]
  %v77 = vld [vmem:[%s2 + $0x48] sm:$0xff]
  %v78 = vld [vmem:[%s2 + $0x50] sm:$0xff]
  %v79 = vld [vmem:[%s2 + $0x58] sm:$0xff]
  %v80 = vld [vmem:[%s2 + $0x60] sm:$0xff]
  %v81 = vld [vmem:[%s2 + $0x68] sm:$0xff]
  %v82 = vld [vmem:[%s2 + $0x70] sm:$0xff]
  %v83 = vld [vmem:[%s2 + $0x78] sm:$0xff]
  %v84 = vld [vmem:[%s2 + $0x80] sm:$0xff]
  %v85 = vld [vmem:[%s2 + $0x88] sm:$0xff]
  %v86 = vld [vmem:[%s2 + $0x90] sm:$0xff]
  %v87 = vld [vmem:[%s2 + $0x98] sm:$0xff]
  %v88 = vld [vmem:[%s2 + $0xa0] sm:$0xff]
  %v89 = vld [vmem:[%s2 + $0xa8] sm:$0xff]
  %v90 = vld [vmem:[%s2 + $0xb0] sm:$0xff]
  %v91 = vld [vmem:[%s2 + $0xb8] sm:$0xff]
  %v92 = vld [vmem:[%s2 + $0xc0] sm:$0xff]
  %v93 = vld [vmem:[%s2 + $0xc8] sm:$0xff]
  %v94 = vld [vmem:[%s2 + $0xd0] sm:$0xff]
  %v95 = vld [vmem:[%s2 + $0xd8] sm:$0xff]
  %v96 = vld [vmem:[%s2 + $0xe0] sm:$0xff]
  %v97 = vld [vmem:[%s2 + $0xe8] sm:$0xff]
  %v98 = vld [vmem:[%s2 + $0xf0] sm:$0xff]
  %v99 = vld [vmem:[%s2 + $0xf8] sm:$0xff]
  %101 = vset.pattern.permute.xlu0 0
  %102 = vperm.xlu0 %101, %v68
  %v103 = vpop.permute.xlu0 %102
  %106 = vset.pattern.permute.xlu0 0
  %107 = vperm.xlu0 %106, %v69
  %v108 = vpop.permute.xlu0 %107
  %111 = vset.pattern.permute.xlu0 0
  %112 = vperm.xlu0 %111, %v70
  %v113 = vpop.permute.xlu0 %112
  %116 = vset.pattern.permute.xlu0 0
  %117 = vperm.xlu0 %116, %v71
  %v118 = vpop.permute.xlu0 %117
  %121 = vset.pattern.permute.xlu0 0
  %122 = vperm.xlu0 %121, %v72
  %v123 = vpop.permute.xlu0 %122
  %126 = vset.pattern.permute.xlu0 0
  %127 = vperm.xlu0 %126, %v73
  %v128 = vpop.permute.xlu0 %127
  %131 = vset.pattern.permute.xlu0 0
  %132 = vperm.xlu0 %131, %v74
  %v133 = vpop.permute.xlu0 %132
  %136 = vset.pattern.permute.xlu0 0
  %137 = vperm.xlu0 %136, %v75
  %v138 = vpop.permute.xlu0 %137
  %141 = vset.pattern.permute.xlu0 0
  %142 = vperm.xlu0 %141, %v76
  %v143 = vpop.permute.xlu0 %142
  %146 = vset.pattern.permute.xlu0 0
  %147 = vperm.xlu0 %146, %v77
  %v148 = vpop.permute.xlu0 %147
  %151 = vset.pattern.permute.xlu0 0
  %152 = vperm.xlu0 %151, %v78
  %v153 = vpop.permute.xlu0 %152
  %156 = vset.pattern.permute.xlu0 0
  %157 = vperm.xlu0 %156, %v79
  %v158 = vpop.permute.xlu0 %157
  %161 = vset.pattern.permute.xlu0 0
  %162 = vperm.xlu0 %161, %v80
  %v163 = vpop.permute.xlu0 %162
  %166 = vset.pattern.permute.xlu0 0
  %167 = vperm.xlu0 %166, %v81
  %v168 = vpop.permute.xlu0 %167
  %171 = vset.pattern.permute.xlu0 0
  %172 = vperm.xlu0 %171, %v82
  %v173 = vpop.permute.xlu0 %172
  %176 = vset.pattern.permute.xlu0 0
  %177 = vperm.xlu0 %176, %v83
  %v178 = vpop.permute.xlu0 %177
  %181 = vset.pattern.permute.xlu0 0
  %182 = vperm.xlu0 %181, %v84
  %v183 = vpop.permute.xlu0 %182
  %186 = vset.pattern.permute.xlu0 0
  %187 = vperm.xlu0 %186, %v85
  %v188 = vpop.permute.xlu0 %187
  %191 = vset.pattern.permute.xlu0 0
  %192 = vperm.xlu0 %191, %v86
  %v193 = vpop.permute.xlu0 %192
  %196 = vset.pattern.permute.xlu0 0
  %197 = vperm.xlu0 %196, %v87
  %v198 = vpop.permute.xlu0 %197
  %201 = vset.pattern.permute.xlu0 0
  %202 = vperm.xlu0 %201, %v88
  %v203 = vpop.permute.xlu0 %202
  %206 = vset.pattern.permute.xlu0 0
  %207 = vperm.xlu0 %206, %v89
  %v208 = vpop.permute.xlu0 %207
  %211 = vset.pattern.permute.xlu0 0
  %212 = vperm.xlu0 %211, %v90
  %v213 = vpop.permute.xlu0 %212
  %216 = vset.pattern.permute.xlu0 0
  %217 = vperm.xlu0 %216, %v91
  %v218 = vpop.permute.xlu0 %217
  %221 = vset.pattern.permute.xlu0 0
  %222 = vperm.xlu0 %221, %v92
  %v223 = vpop.permute.xlu0 %222
  %226 = vset.pattern.permute.xlu0 0
  %227 = vperm.xlu0 %226, %v93
  %v228 = vpop.permute.xlu0 %227
  %231 = vset.pattern.permute.xlu0 0
  %232 = vperm.xlu0 %231, %v94
  %v233 = vpop.permute.xlu0 %232
  %236 = vset.pattern.permute.xlu0 0
  %237 = vperm.xlu0 %236, %v95
  %v238 = vpop.permute.xlu0 %237
  %241 = vset.pattern.permute.xlu0 0
  %242 = vperm.xlu0 %241, %v96
  %v243 = vpop.permute.xlu0 %242
  %246 = vset.pattern.permute.xlu0 0
  %247 = vperm.xlu0 %246, %v97
  %v248 = vpop.permute.xlu0 %247
  %251 = vset.pattern.permute.xlu0 0
  %252 = vperm.xlu0 %251, %v98
  %v253 = vpop.permute.xlu0 %252
  %256 = vset.pattern.permute.xlu0 0
  %257 = vperm.xlu0 %256, %v99
  %v258 = vpop.permute.xlu0 %257
  %v292 = vunpack.c.l.b16 %v34
  %v293 = vunpack.c.l.b16 %v35
  %v294 = vunpack.c.l.b16 %v36
  %v295 = vunpack.c.l.b16 %v37
  %v296 = vunpack.c.l.b16 %v38
  %v297 = vunpack.c.l.b16 %v39
  %v298 = vunpack.c.l.b16 %v40
  %v299 = vunpack.c.l.b16 %v41
  %v300 = vunpack.c.l.b16 %v42
  %v301 = vunpack.c.l.b16 %v43
  %v302 = vunpack.c.l.b16 %v44
  %v303 = vunpack.c.l.b16 %v45
  %v304 = vunpack.c.l.b16 %v46
  %v305 = vunpack.c.l.b16 %v47
  %v306 = vunpack.c.l.b16 %v48
  %v307 = vunpack.c.l.b16 %v49
  %v308 = vunpack.c.l.b16 %v50
  %v309 = vunpack.c.l.b16 %v51
  %v310 = vunpack.c.l.b16 %v52
  %v311 = vunpack.c.l.b16 %v53
  %v312 = vunpack.c.l.b16 %v54
  %v313 = vunpack.c.l.b16 %v55
  %v314 = vunpack.c.l.b16 %v56
  %v315 = vunpack.c.l.b16 %v57
  %v316 = vunpack.c.l.b16 %v58
  %v317 = vunpack.c.l.b16 %v59
  %v318 = vunpack.c.l.b16 %v60
  %v319 = vunpack.c.l.b16 %v61
  %v320 = vunpack.c.l.b16 %v62
  %v321 = vunpack.c.l.b16 %v63
  %v322 = vunpack.c.l.b16 %v64
  %v323 = vunpack.c.l.b16 %v65
  %v324 = vpack.c.b16 %v293, %v292
  %v325 = vpack.c.b16 %v295, %v294
  %v326 = vpack.c.b16 %v297, %v296
  %v327 = vpack.c.b16 %v299, %v298
  %v328 = vpack.c.b16 %v301, %v300
  %v329 = vpack.c.b16 %v303, %v302
  %v330 = vpack.c.b16 %v305, %v304
  %v331 = vpack.c.b16 %v307, %v306
  %v332 = vpack.c.b16 %v309, %v308
  %v333 = vpack.c.b16 %v311, %v310
  %v334 = vpack.c.b16 %v313, %v312
  %v335 = vpack.c.b16 %v315, %v314
  %v336 = vpack.c.b16 %v317, %v316
  %v337 = vpack.c.b16 %v319, %v318
  %v338 = vpack.c.b16 %v321, %v320
  %v339 = vpack.c.b16 %v323, %v322
  %v342 = vunpack.c.l.b16 %v66
  %v343 = vunpack.c.l.b16 %v67
  %v344 = vpack.c.b16 %v343, %v342
  %vm346 = vcmask 130048
  %v348 = vsel %vm346, %v324, 0
  %v351 = vsel %vm346, %v325, 0
  %v354 = vsel %vm346, %v326, 0
  %v357 = vsel %vm346, %v327, 0
  %v360 = vsel %vm346, %v328, 0
  %v363 = vsel %vm346, %v329, 0
  %v366 = vsel %vm346, %v330, 0
  %v369 = vsel %vm346, %v331, 0
  %v372 = vsel %vm346, %v332, 0
  %v375 = vsel %vm346, %v333, 0
  %v378 = vsel %vm346, %v334, 0
  %v381 = vsel %vm346, %v335, 0
  %v384 = vsel %vm346, %v336, 0
  %v387 = vsel %vm346, %v337, 0
  %v390 = vsel %vm346, %v338, 0
  %v393 = vsel %vm346, %v339, 0
  %395 = vmatprep.subr.bf16.mxu0 0
  %396 = vmatpush1.bf16.msra.mxu0 %v344
  %397 = vmatprep.subr.bf16.mxu0 0
  %398 = vmatpush1.bf16.msra.mxu0 0
  %399 = vmatprep.subr.bf16.mxu0 0
  %400 = vmatpush1.bf16.msra.mxu0 0
  %401 = vmatprep.subr.bf16.mxu0 0
  %402 = vmatpush1.bf16.msra.mxu0 0
  %403 = vmatprep.subr.bf16.mxu0 0
  %404 = vmatpush1.bf16.msra.mxu0 0
  %405 = vmatprep.subr.bf16.mxu0 0
  %406 = vmatpush1.bf16.msra.mxu0 0
  %407 = vmatprep.subr.bf16.mxu0 0
  %408 = vmatpush1.bf16.msra.mxu0 0
  %409 = vmatprep.subr.bf16.mxu0 0
  %410 = vmatpush1.bf16.msra.mxu0 0
  %411 = vmatprep.subr.bf16.mxu0 0
  %412 = vmatpush1.bf16.msra.mxu0 0
  %413 = vmatprep.subr.bf16.mxu0 0
  %414 = vmatpush1.bf16.msra.mxu0 0
  %415 = vmatprep.subr.bf16.mxu0 0
  %416 = vmatpush1.bf16.msra.mxu0 0
  %417 = vmatprep.subr.bf16.mxu0 0
  %418 = vmatpush1.bf16.msra.mxu0 0
  %419 = vmatprep.subr.bf16.mxu0 0
  %420 = vmatpush1.bf16.msra.mxu0 0
  %421 = vmatprep.subr.bf16.mxu0 0
  %422 = vmatpush1.bf16.msra.mxu0 0
  %423 = vmatprep.subr.bf16.mxu0 0
  %424 = vmatpush1.bf16.msra.mxu0 0
  %425 = vmatprep.subr.bf16.mxu0 0
  %426 = vmatpush1.bf16.msra.mxu0 0
  %427 = vmatprep.mubr.bf16.mxu0 0
  %428 = vmatmul.mubr.bf16.gmra.mrb[0].mxu0 %v348
  %v429 = vpop.f32.mrb[0].mxu0
  %v430 = vadd.f32 %v103, %v429
  %v431 = vpop.f32.mrb[0].mxu0
  %v432 = vpop.f32.mrb[0].mxu0
  %v433 = vadd.f32 %v108, %v432
  %v434 = vpop.f32.mrb[0].mxu0
  %435 = vmatprep.mubr.bf16.mxu0 0
  %436 = vmatmul.mubr.bf16.gmra.mrb[0].mxu0 %v351
  %v437 = vpop.f32.mrb[0].mxu0
  %v438 = vadd.f32 %v113, %v437
  %v439 = vpop.f32.mrb[0].mxu0
  %v440 = vpop.f32.mrb[0].mxu0
  %v441 = vadd.f32 %v118, %v440
  %v442 = vpop.f32.mrb[0].mxu0
  %443 = vmatprep.mubr.bf16.mxu0 0
  %444 = vmatmul.mubr.bf16.gmra.mrb[0].mxu0 %v354
  %v445 = vpop.f32.mrb[0].mxu0
  %v446 = vadd.f32 %v123, %v445
  %v447 = vpop.f32.mrb[0].mxu0
  %v448 = vpop.f32.mrb[0].mxu0
  %v449 = vadd.f32 %v128, %v448
  %v450 = vpop.f32.mrb[0].mxu0
  %451 = vmatprep.mubr.bf16.mxu0 0
  %452 = vmatmul.mubr.bf16.gmra.mrb[0].mxu0 %v357
  %v453 = vpop.f32.mrb[0].mxu0
  %v454 = vadd.f32 %v133, %v453
  %v455 = vpop.f32.mrb[0].mxu0
  %v456 = vpop.f32.mrb[0].mxu0
  %v457 = vadd.f32 %v138, %v456
  %v458 = vpop.f32.mrb[0].mxu0
  %459 = vmatprep.mubr.bf16.mxu0 0
  %460 = vmatmul.mubr.bf16.gmra.mrb[0].mxu0 %v360
  %v461 = vpop.f32.mrb[0].mxu0
  %v462 = vadd.f32 %v143, %v461
  %v463 = vpop.f32.mrb[0].mxu0
  %v464 = vpop.f32.mrb[0].mxu0
  %v465 = vadd.f32 %v148, %v464
  %v466 = vpop.f32.mrb[0].mxu0
  %467 = vmatprep.mubr.bf16.mxu0 0
  %468 = vmatmul.mubr.bf16.gmra.mrb[0].mxu0 %v363
  %v469 = vpop.f32.mrb[0].mxu0
  %v470 = vadd.f32 %v153, %v469
  %v471 = vpop.f32.mrb[0].mxu0
  %v472 = vpop.f32.mrb[0].mxu0
  %v473 = vadd.f32 %v158, %v472
  %v474 = vpop.f32.mrb[0].mxu0
  %475 = vmatprep.mubr.bf16.mxu0 0
  %476 = vmatmul.mubr.bf16.gmra.mrb[0].mxu0 %v366
  %v477 = vpop.f32.mrb[0].mxu0
  %v478 = vadd.f32 %v163, %v477
  %v479 = vpop.f32.mrb[0].mxu0
  %v480 = vpop.f32.mrb[0].mxu0
  %v481 = vadd.f32 %v168, %v480
  %v482 = vpop.f32.mrb[0].mxu0
  %483 = vmatprep.mubr.bf16.mxu0 0
  %484 = vmatmul.mubr.bf16.gmra.mrb[0].mxu0 %v369
  %v485 = vpop.f32.mrb[0].mxu0
  %v486 = vadd.f32 %v173, %v485
  %v487 = vpop.f32.mrb[0].mxu0
  %v488 = vpop.f32.mrb[0].mxu0
  %v489 = vadd.f32 %v178, %v488
  %v490 = vpop.f32.mrb[0].mxu0
  %491 = vmatprep.mubr.bf16.mxu0 0
  %492 = vmatmul.mubr.bf16.gmra.mrb[0].mxu0 %v372
  %v493 = vpop.f32.mrb[0].mxu0
  %v494 = vadd.f32 %v183, %v493
  %v495 = vpop.f32.mrb[0].mxu0
  %v496 = vpop.f32.mrb[0].mxu0
  %v497 = vadd.f32 %v188, %v496
  %v498 = vpop.f32.mrb[0].mxu0
  %499 = vmatprep.mubr.bf16.mxu0 0
  %500 = vmatmul.mubr.bf16.gmra.mrb[0].mxu0 %v375
  %v501 = vpop.f32.mrb[0].mxu0
  %v502 = vadd.f32 %v193, %v501
  %v503 = vpop.f32.mrb[0].mxu0
  %v504 = vpop.f32.mrb[0].mxu0
  %v505 = vadd.f32 %v198, %v504
  %v506 = vpop.f32.mrb[0].mxu0
  %507 = vmatprep.mubr.bf16.mxu0 0
  %508 = vmatmul.mubr.bf16.gmra.mrb[0].mxu0 %v378
  %v509 = vpop.f32.mrb[0].mxu0
  %v510 = vadd.f32 %v203, %v509
  %v511 = vpop.f32.mrb[0].mxu0
  %v512 = vpop.f32.mrb[0].mxu0
  %v513 = vadd.f32 %v208, %v512
  %v514 = vpop.f32.mrb[0].mxu0
  %515 = vmatprep.mubr.bf16.mxu0 0
  %516 = vmatmul.mubr.bf16.gmra.mrb[0].mxu0 %v381
  %v517 = vpop.f32.mrb[0].mxu0
  %v518 = vadd.f32 %v213, %v517
  %v519 = vpop.f32.mrb[0].mxu0
  %v520 = vpop.f32.mrb[0].mxu0
  %v521 = vadd.f32 %v218, %v520
  %v522 = vpop.f32.mrb[0].mxu0
  %523 = vmatprep.mubr.bf16.mxu0 0
  %524 = vmatmul.mubr.bf16.gmra.mrb[0].mxu0 %v384
  %v525 = vpop.f32.mrb[0].mxu0
  %v526 = vadd.f32 %v223, %v525
  %v527 = vpop.f32.mrb[0].mxu0
  %v528 = vpop.f32.mrb[0].mxu0
  %v529 = vadd.f32 %v228, %v528
  %v530 = vpop.f32.mrb[0].mxu0
  %531 = vmatprep.mubr.bf16.mxu0 0
  %532 = vmatmul.mubr.bf16.gmra.mrb[0].mxu0 %v387
  %v533 = vpop.f32.mrb[0].mxu0
  %v534 = vadd.f32 %v233, %v533
  %v535 = vpop.f32.mrb[0].mxu0
  %v536 = vpop.f32.mrb[0].mxu0
  %v537 = vadd.f32 %v238, %v536
  %v538 = vpop.f32.mrb[0].mxu0
  %539 = vmatprep.mubr.bf16.mxu0 0
  %540 = vmatmul.mubr.bf16.gmra.mrb[0].mxu0 %v390
  %v541 = vpop.f32.mrb[0].mxu0
  %v542 = vadd.f32 %v243, %v541
  %v543 = vpop.f32.mrb[0].mxu0
  %v544 = vpop.f32.mrb[0].mxu0
  %v545 = vadd.f32 %v248, %v544
  %v546 = vpop.f32.mrb[0].mxu0
  %547 = vmatprep.mubr.bf16.mxu0 0
  %548 = vmatmul.mubr.bf16.gmra.mrb[0].mxu0 %v393
  %v549 = vpop.f32.mrb[0].mxu0
  %v550 = vadd.f32 %v253, %v549
  %v551 = vpop.f32.mrb[0].mxu0
  %v552 = vpop.f32.mrb[0].mxu0
  %v553 = vadd.f32 %v258, %v552
  %v554 = vpop.f32.mrb[0].mxu0
  %555 = vdwg.mxu0
  %v556 = vmax.f32 %v430, 0.0
  %v557 = vmax.f32 %v433, 0.0
  %v558 = vmax.f32 %v438, 0.0
  %v559 = vmax.f32 %v441, 0.0
  %v560 = vmax.f32 %v446, 0.0
  %v561 = vmax.f32 %v449, 0.0
  %v562 = vmax.f32 %v454, 0.0
  %v563 = vmax.f32 %v457, 0.0
  %v564 = vmax.f32 %v462, 0.0
  %v565 = vmax.f32 %v465, 0.0
  %v566 = vmax.f32 %v470, 0.0
  %v567 = vmax.f32 %v473, 0.0
  %v568 = vmax.f32 %v478, 0.0
  %v569 = vmax.f32 %v481, 0.0
  %v570 = vmax.f32 %v486, 0.0
  %v571 = vmax.f32 %v489, 0.0
  %v572 = vmax.f32 %v494, 0.0
  %v573 = vmax.f32 %v497, 0.0
  %v574 = vmax.f32 %v502, 0.0
  %v575 = vmax.f32 %v505, 0.0
  %v576 = vmax.f32 %v510, 0.0
  %v577 = vmax.f32 %v513, 0.0
  %v578 = vmax.f32 %v518, 0.0
  %v579 = vmax.f32 %v521, 0.0
  %v580 = vmax.f32 %v526, 0.0
  %v581 = vmax.f32 %v529, 0.0
  %v582 = vmax.f32 %v534, 0.0
  %v583 = vmax.f32 %v537, 0.0
  %v584 = vmax.f32 %v542, 0.0
  %v585 = vmax.f32 %v545, 0.0
  %v586 = vmax.f32 %v550, 0.0
  %v587 = vmax.f32 %v553, 0.0
  %v588 = vld [vmem:[%s3] sm:$0xff]
  %v589 = vld [vmem:[%s3 + $0x8] sm:$0xff]
  %v590 = vld [vmem:[%s3 + $0x10] sm:$0xff]
  %v591 = vld [vmem:[%s3 + $0x18] sm:$0xff]
  %v592 = vld [vmem:[%s3 + $0x20] sm:$0xff]
  %v593 = vld [vmem:[%s3 + $0x28] sm:$0xff]
  %v594 = vld [vmem:[%s3 + $0x30] sm:$0xff]
  %v595 = vld [vmem:[%s3 + $0x38] sm:$0xff]
  %v596 = vld [vmem:[%s3 + $0x40] sm:$0xff]
  %v597 = vld [vmem:[%s3 + $0x48] sm:$0xff]
  %v598 = vld [vmem:[%s3 + $0x50] sm:$0xff]
  %v599 = vld [vmem:[%s3 + $0x58] sm:$0xff]
  %v600 = vld [vmem:[%s3 + $0x60] sm:$0xff]
  %v601 = vld [vmem:[%s3 + $0x68] sm:$0xff]
  %v602 = vld [vmem:[%s3 + $0x70] sm:$0xff]
  %v603 = vld [vmem:[%s3 + $0x78] sm:$0xff]
  %v604 = vld [vmem:[%s3 + $0x80] sm:$0xff]
  %v605 = vld [vmem:[%s3 + $0x88] sm:$0xff]
  %v606 = vld [vmem:[%s3 + $0x90] sm:$0xff]
  %v607 = vld [vmem:[%s3 + $0x98] sm:$0xff]
  %v608 = vld [vmem:[%s3 + $0xa0] sm:$0xff]
  %v609 = vld [vmem:[%s3 + $0xa8] sm:$0xff]
  %v610 = vld [vmem:[%s3 + $0xb0] sm:$0xff]
  %v611 = vld [vmem:[%s3 + $0xb8] sm:$0xff]
  %v612 = vld [vmem:[%s3 + $0xc0] sm:$0xff]
  %v613 = vld [vmem:[%s3 + $0xc8] sm:$0xff]
  %v614 = vld [vmem:[%s3 + $0xd0] sm:$0xff]
  %v615 = vld [vmem:[%s3 + $0xd8] sm:$0xff]
  %v616 = vld [vmem:[%s3 + $0xe0] sm:$0xff]
  %v617 = vld [vmem:[%s3 + $0xe8] sm:$0xff]
  %v618 = vld [vmem:[%s3 + $0xf0] sm:$0xff]
  %v619 = vld [vmem:[%s3 + $0xf8] sm:$0xff]
  %v620 = vpack.c.bf16 %v557, %v556
  %v621 = vpack.c.bf16 %v559, %v558
  %v622 = vpack.c.bf16 %v561, %v560
  %v623 = vpack.c.bf16 %v563, %v562
  %v624 = vpack.c.bf16 %v565, %v564
  %v625 = vpack.c.bf16 %v567, %v566
  %v626 = vpack.c.bf16 %v569, %v568
  %v627 = vpack.c.bf16 %v571, %v570
  %v628 = vpack.c.bf16 %v573, %v572
  %v629 = vpack.c.bf16 %v575, %v574
  %v630 = vpack.c.bf16 %v577, %v576
  %v631 = vpack.c.bf16 %v579, %v578
  %v632 = vpack.c.bf16 %v581, %v580
  %v633 = vpack.c.bf16 %v583, %v582
  %v634 = vpack.c.bf16 %v585, %v584
  %v635 = vpack.c.bf16 %v587, %v586
  %v636 = vld [vmem:[%s4] sm:$0xff]
  %v637 = vld [vmem:[%s4 + $0x8] sm:$0xff]
  %v638 = vld [vmem:[%s4 + $0x10] sm:$0xff]
  %v639 = vld [vmem:[%s4 + $0x18] sm:$0xff]
  %v640 = vld [vmem:[%s4 + $0x20] sm:$0xff]
  %v641 = vld [vmem:[%s4 + $0x28] sm:$0xff]
  %v642 = vld [vmem:[%s4 + $0x30] sm:$0xff]
  %v643 = vld [vmem:[%s4 + $0x38] sm:$0xff]
  %v644 = vld [vmem:[%s4 + $0x40] sm:$0xff]
  %v645 = vld [vmem:[%s4 + $0x48] sm:$0xff]
  %v646 = vld [vmem:[%s4 + $0x50] sm:$0xff]
  %v647 = vld [vmem:[%s4 + $0x58] sm:$0xff]
  %v648 = vld [vmem:[%s4 + $0x60] sm:$0xff]
  %v649 = vld [vmem:[%s4 + $0x68] sm:$0xff]
  %v650 = vld [vmem:[%s4 + $0x70] sm:$0xff]
  %v651 = vld [vmem:[%s4 + $0x78] sm:$0xff]
  %v652 = vld [vmem:[%s4 + $0x80] sm:$0xff]
  %v653 = vld [vmem:[%s4 + $0x88] sm:$0xff]
  %v654 = vld [vmem:[%s4 + $0x90] sm:$0xff]
  %v655 = vld [vmem:[%s4 + $0x98] sm:$0xff]
  %v656 = vld [vmem:[%s4 + $0xa0] sm:$0xff]
  %v657 = vld [vmem:[%s4 + $0xa8] sm:$0xff]
  %v658 = vld [vmem:[%s4 + $0xb0] sm:$0xff]
  %v659 = vld [vmem:[%s4 + $0xb8] sm:$0xff]
  %v660 = vld [vmem:[%s4 + $0xc0] sm:$0xff]
  %v661 = vld [vmem:[%s4 + $0xc8] sm:$0xff]
  %v662 = vld [vmem:[%s4 + $0xd0] sm:$0xff]
  %v663 = vld [vmem:[%s4 + $0xd8] sm:$0xff]
  %v664 = vld [vmem:[%s4 + $0xe0] sm:$0xff]
  %v665 = vld [vmem:[%s4 + $0xe8] sm:$0xff]
  %v666 = vld [vmem:[%s4 + $0xf0] sm:$0xff]
  %v667 = vld [vmem:[%s4 + $0xf8] sm:$0xff]
  %669 = vset.pattern.permute.xlu0 0
  %670 = vperm.xlu0 %669, %v636
  %v671 = vpop.permute.xlu0 %670
  %674 = vset.pattern.permute.xlu0 0
  %675 = vperm.xlu0 %674, %v637
  %v676 = vpop.permute.xlu0 %675
  %679 = vset.pattern.permute.xlu0 0
  %680 = vperm.xlu0 %679, %v638
  %v681 = vpop.permute.xlu0 %680
  %684 = vset.pattern.permute.xlu0 0
  %685 = vperm.xlu0 %684, %v639
  %v686 = vpop.permute.xlu0 %685
  %689 = vset.pattern.permute.xlu0 0
  %690 = vperm.xlu0 %689, %v640
  %v691 = vpop.permute.xlu0 %690
  %694 = vset.pattern.permute.xlu0 0
  %695 = vperm.xlu0 %694, %v641
  %v696 = vpop.permute.xlu0 %695
  %699 = vset.pattern.permute.xlu0 0
  %700 = vperm.xlu0 %699, %v642
  %v701 = vpop.permute.xlu0 %700
  %704 = vset.pattern.permute.xlu0 0
  %705 = vperm.xlu0 %704, %v643
  %v706 = vpop.permute.xlu0 %705
  %709 = vset.pattern.permute.xlu0 0
  %710 = vperm.xlu0 %709, %v644
  %v711 = vpop.permute.xlu0 %710
  %714 = vset.pattern.permute.xlu0 0
  %715 = vperm.xlu0 %714, %v645
  %v716 = vpop.permute.xlu0 %715
  %719 = vset.pattern.permute.xlu0 0
  %720 = vperm.xlu0 %719, %v646
  %v721 = vpop.permute.xlu0 %720
  %724 = vset.pattern.permute.xlu0 0
  %725 = vperm.xlu0 %724, %v647
  %v726 = vpop.permute.xlu0 %725
  %729 = vset.pattern.permute.xlu0 0
  %730 = vperm.xlu0 %729, %v648
  %v731 = vpop.permute.xlu0 %730
  %734 = vset.pattern.permute.xlu0 0
  %735 = vperm.xlu0 %734, %v649
  %v736 = vpop.permute.xlu0 %735
  %739 = vset.pattern.permute.xlu0 0
  %740 = vperm.xlu0 %739, %v650
  %v741 = vpop.permute.xlu0 %740
  %744 = vset.pattern.permute.xlu0 0
  %745 = vperm.xlu0 %744, %v651
  %v746 = vpop.permute.xlu0 %745
  %749 = vset.pattern.permute.xlu0 0
  %750 = vperm.xlu0 %749, %v652
  %v751 = vpop.permute.xlu0 %750
  %754 = vset.pattern.permute.xlu0 0
  %755 = vperm.xlu0 %754, %v653
  %v756 = vpop.permute.xlu0 %755
  %759 = vset.pattern.permute.xlu0 0
  %760 = vperm.xlu0 %759, %v654
  %v761 = vpop.permute.xlu0 %760
  %764 = vset.pattern.permute.xlu0 0
  %765 = vperm.xlu0 %764, %v655
  %v766 = vpop.permute.xlu0 %765
  %769 = vset.pattern.permute.xlu0 0
  %770 = vperm.xlu0 %769, %v656
  %v771 = vpop.permute.xlu0 %770
  %774 = vset.pattern.permute.xlu0 0
  %775 = vperm.xlu0 %774, %v657
  %v776 = vpop.permute.xlu0 %775
  %779 = vset.pattern.permute.xlu0 0
  %780 = vperm.xlu0 %779, %v658
  %v781 = vpop.permute.xlu0 %780
  %784 = vset.pattern.permute.xlu0 0
  %785 = vperm.xlu0 %784, %v659
  %v786 = vpop.permute.xlu0 %785
  %789 = vset.pattern.permute.xlu0 0
  %790 = vperm.xlu0 %789, %v660
  %v791 = vpop.permute.xlu0 %790
  %794 = vset.pattern.permute.xlu0 0
  %795 = vperm.xlu0 %794, %v661
  %v796 = vpop.permute.xlu0 %795
  %799 = vset.pattern.permute.xlu0 0
  %800 = vperm.xlu0 %799, %v662
  %v801 = vpop.permute.xlu0 %800
  %804 = vset.pattern.permute.xlu0 0
  %805 = vperm.xlu0 %804, %v663
  %v806 = vpop.permute.xlu0 %805
  %809 = vset.pattern.permute.xlu0 0
  %810 = vperm.xlu0 %809, %v664
  %v811 = vpop.permute.xlu0 %810
  %814 = vset.pattern.permute.xlu0 0
  %815 = vperm.xlu0 %814, %v665
  %v816 = vpop.permute.xlu0 %815
  %819 = vset.pattern.permute.xlu0 0
  %820 = vperm.xlu0 %819, %v666
  %v821 = vpop.permute.xlu0 %820
  %824 = vset.pattern.permute.xlu0 0
  %825 = vperm.xlu0 %824, %v667
  %v826 = vpop.permute.xlu0 %825
  %v860 = vunpack.c.l.b16 %v588
  %v861 = vunpack.c.h.b16 %v588
  %v862 = vunpack.c.l.b16 %v589
  %v863 = vunpack.c.h.b16 %v589
  %v864 = vunpack.c.l.b16 %v590
  %v865 = vunpack.c.h.b16 %v590
  %v866 = vunpack.c.l.b16 %v591
  %v867 = vunpack.c.h.b16 %v591
  %v868 = vunpack.c.l.b16 %v592
  %v869 = vunpack.c.h.b16 %v592
  %v870 = vunpack.c.l.b16 %v593
  %v871 = vunpack.c.h.b16 %v593
  %v872 = vunpack.c.l.b16 %v594
  %v873 = vunpack.c.h.b16 %v594
  %v874 = vunpack.c.l.b16 %v595
  %v875 = vunpack.c.h.b16 %v595
  %v876 = vunpack.c.l.b16 %v596
  %v877 = vunpack.c.h.b16 %v596
  %v878 = vunpack.c.l.b16 %v597
  %v879 = vunpack.c.h.b16 %v597
  %v880 = vunpack.c.l.b16 %v598
  %v881 = vunpack.c.h.b16 %v598
  %v882 = vunpack.c.l.b16 %v599
  %v883 = vunpack.c.h.b16 %v599
  %v884 = vunpack.c.l.b16 %v600
  %v885 = vunpack.c.h.b16 %v600
  %v886 = vunpack.c.l.b16 %v601
  %v887 = vunpack.c.h.b16 %v601
  %v888 = vunpack.c.l.b16 %v602
  %v889 = vunpack.c.h.b16 %v602
  %v890 = vunpack.c.l.b16 %v603
  %v891 = vunpack.c.h.b16 %v603
  %v892 = vunpack.c.l.b16 %v604
  %v893 = vunpack.c.h.b16 %v604
  %v894 = vunpack.c.l.b16 %v605
  %v895 = vunpack.c.h.b16 %v605
  %v896 = vunpack.c.l.b16 %v606
  %v897 = vunpack.c.h.b16 %v606
  %v898 = vunpack.c.l.b16 %v607
  %v899 = vunpack.c.h.b16 %v607
  %v900 = vunpack.c.l.b16 %v608
  %v901 = vunpack.c.h.b16 %v608
  %v902 = vunpack.c.l.b16 %v609
  %v903 = vunpack.c.h.b16 %v609
  %v904 = vunpack.c.l.b16 %v610
  %v905 = vunpack.c.h.b16 %v610
  %v906 = vunpack.c.l.b16 %v611
  %v907 = vunpack.c.h.b16 %v611
  %v908 = vunpack.c.l.b16 %v612
  %v909 = vunpack.c.h.b16 %v612
  %v910 = vunpack.c.l.b16 %v613
  %v911 = vunpack.c.h.b16 %v613
  %v912 = vunpack.c.l.b16 %v614
  %v913 = vunpack.c.h.b16 %v614
  %v914 = vunpack.c.l.b16 %v615
  %v915 = vunpack.c.h.b16 %v615
  %v916 = vunpack.c.l.b16 %v616
  %v917 = vunpack.c.h.b16 %v616
  %v918 = vunpack.c.l.b16 %v617
  %v919 = vunpack.c.h.b16 %v617
  %v920 = vunpack.c.l.b16 %v618
  %v921 = vunpack.c.h.b16 %v618
  %v922 = vunpack.c.l.b16 %v619
  %v923 = vunpack.c.h.b16 %v619
  %v924 = vpack.c.b16 %v862, %v860
  %v925 = vpack.c.b16 %v863, %v861
  %v926 = vpack.c.b16 %v866, %v864
  %v927 = vpack.c.b16 %v867, %v865
  %v928 = vpack.c.b16 %v870, %v868
  %v929 = vpack.c.b16 %v871, %v869
  %v930 = vpack.c.b16 %v874, %v872
  %v931 = vpack.c.b16 %v875, %v873
  %v932 = vpack.c.b16 %v878, %v876
  %v933 = vpack.c.b16 %v879, %v877
  %v934 = vpack.c.b16 %v882, %v880
  %v935 = vpack.c.b16 %v883, %v881
  %v936 = vpack.c.b16 %v886, %v884
  %v937 = vpack.c.b16 %v887, %v885
  %v938 = vpack.c.b16 %v890, %v888
  %v939 = vpack.c.b16 %v891, %v889
  %v940 = vpack.c.b16 %v894, %v892
  %v941 = vpack.c.b16 %v895, %v893
  %v942 = vpack.c.b16 %v898, %v896
  %v943 = vpack.c.b16 %v899, %v897
  %v944 = vpack.c.b16 %v902, %v900
  %v945 = vpack.c.b16 %v903, %v901
  %v946 = vpack.c.b16 %v906, %v904
  %v947 = vpack.c.b16 %v907, %v905
  %v948 = vpack.c.b16 %v910, %v908
  %v949 = vpack.c.b16 %v911, %v909
  %v950 = vpack.c.b16 %v914, %v912
  %v951 = vpack.c.b16 %v915, %v913
  %v952 = vpack.c.b16 %v918, %v916
  %v953 = vpack.c.b16 %v919, %v917
  %v954 = vpack.c.b16 %v922, %v920
  %v955 = vpack.c.b16 %v923, %v921
  %988 = vmatprep.subr.bf16.mxu0 0
  %989 = vmatpush1.bf16.msra.mxu0 %v620
  %990 = vmatprep.subr.bf16.mxu0 0
  %991 = vmatpush1.bf16.msra.mxu0 %v621
  %992 = vmatprep.subr.bf16.mxu0 0
  %993 = vmatpush1.bf16.msra.mxu0 %v622
  %994 = vmatprep.subr.bf16.mxu0 0
  %995 = vmatpush1.bf16.msra.mxu0 %v623
  %996 = vmatprep.subr.bf16.mxu0 0
  %997 = vmatpush1.bf16.msra.mxu0 %v624
  %998 = vmatprep.subr.bf16.mxu0 0
  %999 = vmatpush1.bf16.msra.mxu0 %v625
  %1000 = vmatprep.subr.bf16.mxu0 0
  %1001 = vmatpush1.bf16.msra.mxu0 %v626
  %1002 = vmatprep.subr.bf16.mxu0 0
  %1003 = vmatpush1.bf16.msra.mxu0 %v627
  %1004 = vmatprep.subr.bf16.mxu0 0
  %1005 = vmatpush1.bf16.msra.mxu0 %v628
  %1006 = vmatprep.subr.bf16.mxu0 0
  %1007 = vmatpush1.bf16.msra.mxu0 %v629
  %1008 = vmatprep.subr.bf16.mxu0 0
  %1009 = vmatpush1.bf16.msra.mxu0 %v630
  %1010 = vmatprep.subr.bf16.mxu0 0
  %1011 = vmatpush1.bf16.msra.mxu0 %v631
  %1012 = vmatprep.subr.bf16.mxu0 0
  %1013 = vmatpush1.bf16.msra.mxu0 %v632
  %1014 = vmatprep.subr.bf16.mxu0 0
  %1015 = vmatpush1.bf16.msra.mxu0 %v633
  %1016 = vmatprep.subr.bf16.mxu0 0
  %1017 = vmatpush1.bf16.msra.mxu0 %v634
  %1018 = vmatprep.subr.bf16.mxu0 0
  %1019 = vmatpush1.bf16.msra.mxu0 %v635
  %1020 = vmatprep.mubr.bf16.mxu0 %v925
  %1021 = vmatmul.mubr.bf16.gmra.mrb[0].mxu0 %v924
  %v1022 = vpop.f32.mrb[0].mxu0
  %v1023 = vadd.f32 %v671, %v1022
  %v1024 = vpop.f32.mrb[0].mxu0
  %v1025 = vpop.f32.mrb[0].mxu0
  %v1026 = vadd.f32 %v676, %v1025
  %v1027 = vpop.f32.mrb[0].mxu0
  %1028 = vmatprep.mubr.bf16.mxu0 %v927
  %1029 = vmatmul.mubr.bf16.gmra.mrb[0].mxu0 %v926
  %v1030 = vpop.f32.mrb[0].mxu0
  %v1031 = vadd.f32 %v681, %v1030
  %v1032 = vpop.f32.mrb[0].mxu0
  %v1033 = vpop.f32.mrb[0].mxu0
  %v1034 = vadd.f32 %v686, %v1033
  %v1035 = vpop.f32.mrb[0].mxu0
  %1036 = vmatprep.mubr.bf16.mxu0 %v929
  %1037 = vmatmul.mubr.bf16.gmra.mrb[0].mxu0 %v928
  %v1038 = vpop.f32.mrb[0].mxu0
  %v1039 = vadd.f32 %v691, %v1038
  %v1040 = vpop.f32.mrb[0].mxu0
  %v1041 = vpop.f32.mrb[0].mxu0
  %v1042 = vadd.f32 %v696, %v1041
  %v1043 = vpop.f32.mrb[0].mxu0
  %1044 = vmatprep.mubr.bf16.mxu0 %v931
  %1045 = vmatmul.mubr.bf16.gmra.mrb[0].mxu0 %v930
  %v1046 = vpop.f32.mrb[0].mxu0
  %v1047 = vadd.f32 %v701, %v1046
  %v1048 = vpop.f32.mrb[0].mxu0
  %v1049 = vpop.f32.mrb[0].mxu0
  %v1050 = vadd.f32 %v706, %v1049
  %v1051 = vpop.f32.mrb[0].mxu0
  %1052 = vmatprep.mubr.bf16.mxu0 %v933
  %1053 = vmatmul.mubr.bf16.gmra.mrb[0].mxu0 %v932
  %v1054 = vpop.f32.mrb[0].mxu0
  %v1055 = vadd.f32 %v711, %v1054
  %v1056 = vpop.f32.mrb[0].mxu0
  %v1057 = vpop.f32.mrb[0].mxu0
  %v1058 = vadd.f32 %v716, %v1057
  %v1059 = vpop.f32.mrb[0].mxu0
  %1060 = vmatprep.mubr.bf16.mxu0 %v935
  %1061 = vmatmul.mubr.bf16.gmra.mrb[0].mxu0 %v934
  %v1062 = vpop.f32.mrb[0].mxu0
  %v1063 = vadd.f32 %v721, %v1062
  %v1064 = vpop.f32.mrb[0].mxu0
  %v1065 = vpop.f32.mrb[0].mxu0
  %v1066 = vadd.f32 %v726, %v1065
  %v1067 = vpop.f32.mrb[0].mxu0
  %1068 = vmatprep.mubr.bf16.mxu0 %v937
  %1069 = vmatmul.mubr.bf16.gmra.mrb[0].mxu0 %v936
  %v1070 = vpop.f32.mrb[0].mxu0
  %v1071 = vadd.f32 %v731, %v1070
  %v1072 = vpop.f32.mrb[0].mxu0
  %v1073 = vpop.f32.mrb[0].mxu0
  %v1074 = vadd.f32 %v736, %v1073
  %v1075 = vpop.f32.mrb[0].mxu0
  %1076 = vmatprep.mubr.bf16.mxu0 %v939
  %1077 = vmatmul.mubr.bf16.gmra.mrb[0].mxu0 %v938
  %v1078 = vpop.f32.mrb[0].mxu0
  %v1079 = vadd.f32 %v741, %v1078
  %v1080 = vpop.f32.mrb[0].mxu0
  %v1081 = vpop.f32.mrb[0].mxu0
  %v1082 = vadd.f32 %v746, %v1081
  %v1083 = vpop.f32.mrb[0].mxu0
  %1084 = vmatprep.mubr.bf16.mxu0 %v941
  %1085 = vmatmul.mubr.bf16.gmra.mrb[0].mxu0 %v940
  %v1086 = vpop.f32.mrb[0].mxu0
  %v1087 = vadd.f32 %v751, %v1086
  %v1088 = vpop.f32.mrb[0].mxu0
  %v1089 = vpop.f32.mrb[0].mxu0
  %v1090 = vadd.f32 %v756, %v1089
  %v1091 = vpop.f32.mrb[0].mxu0
  %1092 = vmatprep.mubr.bf16.mxu0 %v943
  %1093 = vmatmul.mubr.bf16.gmra.mrb[0].mxu0 %v942
  %v1094 = vpop.f32.mrb[0].mxu0
  %v1095 = vadd.f32 %v761, %v1094
  %v1096 = vpop.f32.mrb[0].mxu0
  %v1097 = vpop.f32.mrb[0].mxu0
  %v1098 = vadd.f32 %v766, %v1097
  %v1099 = vpop.f32.mrb[0].mxu0
  %1100 = vmatprep.mubr.bf16.mxu0 %v945
  %1101 = vmatmul.mubr.bf16.gmra.mrb[0].mxu0 %v944
  %v1102 = vpop.f32.mrb[0].mxu0
  %v1103 = vadd.f32 %v771, %v1102
  %v1104 = vpop.f32.mrb[0].mxu0
  %v1105 = vpop.f32.mrb[0].mxu0
  %v1106 = vadd.f32 %v776, %v1105
  %v1107 = vpop.f32.mrb[0].mxu0
  %1108 = vmatprep.mubr.bf16.mxu0 %v947
  %1109 = vmatmul.mubr.bf16.gmra.mrb[0].mxu0 %v946
  %v1110 = vpop.f32.mrb[0].mxu0
  %v1111 = vadd.f32 %v781, %v1110
  %v1112 = vpop.f32.mrb[0].mxu0
  %v1113 = vpop.f32.mrb[0].mxu0
  %v1114 = vadd.f32 %v786, %v1113
  %v1115 = vpop.f32.mrb[0].mxu0
  %1116 = vmatprep.mubr.bf16.mxu0 %v949
  %1117 = vmatmul.mubr.bf16.gmra.mrb[0].mxu0 %v948
  %v1118 = vpop.f32.mrb[0].mxu0
  %v1119 = vadd.f32 %v791, %v1118
  %v1120 = vpop.f32.mrb[0].mxu0
  %v1121 = vpop.f32.mrb[0].mxu0
  %v1122 = vadd.f32 %v796, %v1121
  %v1123 = vpop.f32.mrb[0].mxu0
  %1124 = vmatprep.mubr.bf16.mxu0 %v951
  %1125 = vmatmul.mubr.bf16.gmra.mrb[0].mxu0 %v950
  %v1126 = vpop.f32.mrb[0].mxu0
  %v1127 = vadd.f32 %v801, %v1126
  %v1128 = vpop.f32.mrb[0].mxu0
  %v1129 = vpop.f32.mrb[0].mxu0
  %v1130 = vadd.f32 %v806, %v1129
  %v1131 = vpop.f32.mrb[0].mxu0
  %1132 = vmatprep.mubr.bf16.mxu0 %v953
  %1133 = vmatmul.mubr.bf16.gmra.mrb[0].mxu0 %v952
  %v1134 = vpop.f32.mrb[0].mxu0
  %v1135 = vadd.f32 %v811, %v1134
  %v1136 = vpop.f32.mrb[0].mxu0
  %v1137 = vpop.f32.mrb[0].mxu0
  %v1138 = vadd.f32 %v816, %v1137
  %v1139 = vpop.f32.mrb[0].mxu0
  %1140 = vmatprep.mubr.bf16.mxu0 %v955
  %1141 = vmatmul.mubr.bf16.gmra.mrb[0].mxu0 %v954
  %v1142 = vpop.f32.mrb[0].mxu0
  %v1143 = vadd.f32 %v821, %v1142
  %v1144 = vpop.f32.mrb[0].mxu0
  %v1145 = vpop.f32.mrb[0].mxu0
  %v1146 = vadd.f32 %v826, %v1145
  %v1147 = vpop.f32.mrb[0].mxu0
  %1148 = vdwg.mxu0
  %v1149 = vmax.f32 %v1023, 0.0
  %v1150 = vmax.f32 %v1026, 0.0
  %v1151 = vmax.f32 %v1031, 0.0
  %v1152 = vmax.f32 %v1034, 0.0
  %v1153 = vmax.f32 %v1039, 0.0
  %v1154 = vmax.f32 %v1042, 0.0
  %v1155 = vmax.f32 %v1047, 0.0
  %v1156 = vmax.f32 %v1050, 0.0
  %v1157 = vmax.f32 %v1055, 0.0
  %v1158 = vmax.f32 %v1058, 0.0
  %v1159 = vmax.f32 %v1063, 0.0
  %v1160 = vmax.f32 %v1066, 0.0
  %v1161 = vmax.f32 %v1071, 0.0
  %v1162 = vmax.f32 %v1074, 0.0
  %v1163 = vmax.f32 %v1079, 0.0
  %v1164 = vmax.f32 %v1082, 0.0
  %v1165 = vmax.f32 %v1087, 0.0
  %v1166 = vmax.f32 %v1090, 0.0
  %v1167 = vmax.f32 %v1095, 0.0
  %v1168 = vmax.f32 %v1098, 0.0
  %v1169 = vmax.f32 %v1103, 0.0
  %v1170 = vmax.f32 %v1106, 0.0
  %v1171 = vmax.f32 %v1111, 0.0
  %v1172 = vmax.f32 %v1114, 0.0
  %v1173 = vmax.f32 %v1119, 0.0
  %v1174 = vmax.f32 %v1122, 0.0
  %v1175 = vmax.f32 %v1127, 0.0
  %v1176 = vmax.f32 %v1130, 0.0
  %v1177 = vmax.f32 %v1135, 0.0
  %v1178 = vmax.f32 %v1138, 0.0
  %v1179 = vmax.f32 %v1143, 0.0
  %v1180 = vmax.f32 %v1146, 0.0
  %v1181 = vld [vmem:[%s5] sm:$0xff]
  %v1182 = vld [vmem:[%s5 + $0x8] sm:$0xff]
  %v1183 = vld [vmem:[%s5 + $0x10] sm:$0xff]
  %v1184 = vld [vmem:[%s5 + $0x18] sm:$0xff]
  %v1185 = vld [vmem:[%s5 + $0x20] sm:$0xff]
  %v1186 = vld [vmem:[%s5 + $0x28] sm:$0xff]
  %v1187 = vld [vmem:[%s5 + $0x30] sm:$0xff]
  %v1188 = vld [vmem:[%s5 + $0x38] sm:$0xff]
  %v1189 = vld [vmem:[%s5 + $0x40] sm:$0xff]
  %v1190 = vld [vmem:[%s5 + $0x48] sm:$0xff]
  %v1191 = vld [vmem:[%s5 + $0x50] sm:$0xff]
  %v1192 = vld [vmem:[%s5 + $0x58] sm:$0xff]
  %v1193 = vld [vmem:[%s5 + $0x60] sm:$0xff]
  %v1194 = vld [vmem:[%s5 + $0x68] sm:$0xff]
  %v1195 = vld [vmem:[%s5 + $0x70] sm:$0xff]
  %v1196 = vld [vmem:[%s5 + $0x78] sm:$0xff]
  %v1197 = vld [vmem:[%s5 + $0x80] sm:$0xff]
  %v1198 = vld [vmem:[%s5 + $0x88] sm:$0xff]
  %v1199 = vld [vmem:[%s5 + $0x90] sm:$0xff]
  %v1200 = vld [vmem:[%s5 + $0x98] sm:$0xff]
  %v1201 = vld [vmem:[%s5 + $0xa0] sm:$0xff]
  %v1202 = vld [vmem:[%s5 + $0xa8] sm:$0xff]
  %v1203 = vld [vmem:[%s5 + $0xb0] sm:$0xff]
  %v1204 = vld [vmem:[%s5 + $0xb8] sm:$0xff]
  %v1205 = vld [vmem:[%s5 + $0xc0] sm:$0xff]
  %v1206 = vld [vmem:[%s5 + $0xc8] sm:$0xff]
  %v1207 = vld [vmem:[%s5 + $0xd0] sm:$0xff]
  %v1208 = vld [vmem:[%s5 + $0xd8] sm:$0xff]
  %v1209 = vld [vmem:[%s5 + $0xe0] sm:$0xff]
  %v1210 = vld [vmem:[%s5 + $0xe8] sm:$0xff]
  %v1211 = vld [vmem:[%s5 + $0xf0] sm:$0xff]
  %v1212 = vld [vmem:[%s5 + $0xf8] sm:$0xff]
  %v1213 = vpack.c.bf16 %v1150, %v1149
  %v1214 = vpack.c.bf16 %v1152, %v1151
  %v1215 = vpack.c.bf16 %v1154, %v1153
  %v1216 = vpack.c.bf16 %v1156, %v1155
  %v1217 = vpack.c.bf16 %v1158, %v1157
  %v1218 = vpack.c.bf16 %v1160, %v1159
  %v1219 = vpack.c.bf16 %v1162, %v1161
  %v1220 = vpack.c.bf16 %v1164, %v1163
  %v1221 = vpack.c.bf16 %v1166, %v1165
  %v1222 = vpack.c.bf16 %v1168, %v1167
  %v1223 = vpack.c.bf16 %v1170, %v1169
  %v1224 = vpack.c.bf16 %v1172, %v1171
  %v1225 = vpack.c.bf16 %v1174, %v1173
  %v1226 = vpack.c.bf16 %v1176, %v1175
  %v1227 = vpack.c.bf16 %v1178, %v1177
  %v1228 = vpack.c.bf16 %v1180, %v1179
  %v1229 = vld [vmem:[%s6] sm:$0xff]
  %v1230 = vld [vmem:[%s6 + $0x8] sm:$0xff]
  %v1231 = vld [vmem:[%s6 + $0x10] sm:$0xff]
  %v1232 = vld [vmem:[%s6 + $0x18] sm:$0xff]
  %v1233 = vld [vmem:[%s6 + $0x20] sm:$0xff]
  %v1234 = vld [vmem:[%s6 + $0x28] sm:$0xff]
  %v1235 = vld [vmem:[%s6 + $0x30] sm:$0xff]
  %v1236 = vld [vmem:[%s6 + $0x38] sm:$0xff]
  %v1237 = vld [vmem:[%s6 + $0x40] sm:$0xff]
  %v1238 = vld [vmem:[%s6 + $0x48] sm:$0xff]
  %v1239 = vld [vmem:[%s6 + $0x50] sm:$0xff]
  %v1240 = vld [vmem:[%s6 + $0x58] sm:$0xff]
  %v1241 = vld [vmem:[%s6 + $0x60] sm:$0xff]
  %v1242 = vld [vmem:[%s6 + $0x68] sm:$0xff]
  %v1243 = vld [vmem:[%s6 + $0x70] sm:$0xff]
  %v1244 = vld [vmem:[%s6 + $0x78] sm:$0xff]
  %v1245 = vld [vmem:[%s6 + $0x80] sm:$0xff]
  %v1246 = vld [vmem:[%s6 + $0x88] sm:$0xff]
  %v1247 = vld [vmem:[%s6 + $0x90] sm:$0xff]
  %v1248 = vld [vmem:[%s6 + $0x98] sm:$0xff]
  %v1249 = vld [vmem:[%s6 + $0xa0] sm:$0xff]
  %v1250 = vld [vmem:[%s6 + $0xa8] sm:$0xff]
  %v1251 = vld [vmem:[%s6 + $0xb0] sm:$0xff]
  %v1252 = vld [vmem:[%s6 + $0xb8] sm:$0xff]
  %v1253 = vld [vmem:[%s6 + $0xc0] sm:$0xff]
  %v1254 = vld [vmem:[%s6 + $0xc8] sm:$0xff]
  %v1255 = vld [vmem:[%s6 + $0xd0] sm:$0xff]
  %v1256 = vld [vmem:[%s6 + $0xd8] sm:$0xff]
  %v1257 = vld [vmem:[%s6 + $0xe0] sm:$0xff]
  %v1258 = vld [vmem:[%s6 + $0xe8] sm:$0xff]
  %v1259 = vld [vmem:[%s6 + $0xf0] sm:$0xff]
  %v1260 = vld [vmem:[%s6 + $0xf8] sm:$0xff]
  %1262 = vset.pattern.permute.xlu0 0
  %1263 = vperm.xlu0 %1262, %v1229
  %v1264 = vpop.permute.xlu0 %1263
  %1267 = vset.pattern.permute.xlu0 0
  %1268 = vperm.xlu0 %1267, %v1230
  %v1269 = vpop.permute.xlu0 %1268
  %1272 = vset.pattern.permute.xlu0 0
  %1273 = vperm.xlu0 %1272, %v1231
  %v1274 = vpop.permute.xlu0 %1273
  %1277 = vset.pattern.permute.xlu0 0
  %1278 = vperm.xlu0 %1277, %v1232
  %v1279 = vpop.permute.xlu0 %1278
  %1282 = vset.pattern.permute.xlu0 0
  %1283 = vperm.xlu0 %1282, %v1233
  %v1284 = vpop.permute.xlu0 %1283
  %1287 = vset.pattern.permute.xlu0 0
  %1288 = vperm.xlu0 %1287, %v1234
  %v1289 = vpop.permute.xlu0 %1288
  %1292 = vset.pattern.permute.xlu0 0
  %1293 = vperm.xlu0 %1292, %v1235
  %v1294 = vpop.permute.xlu0 %1293
  %1297 = vset.pattern.permute.xlu0 0
  %1298 = vperm.xlu0 %1297, %v1236
  %v1299 = vpop.permute.xlu0 %1298
  %1302 = vset.pattern.permute.xlu0 0
  %1303 = vperm.xlu0 %1302, %v1237
  %v1304 = vpop.permute.xlu0 %1303
  %1307 = vset.pattern.permute.xlu0 0
  %1308 = vperm.xlu0 %1307, %v1238
  %v1309 = vpop.permute.xlu0 %1308
  %1312 = vset.pattern.permute.xlu0 0
  %1313 = vperm.xlu0 %1312, %v1239
  %v1314 = vpop.permute.xlu0 %1313
  %1317 = vset.pattern.permute.xlu0 0
  %1318 = vperm.xlu0 %1317, %v1240
  %v1319 = vpop.permute.xlu0 %1318
  %1322 = vset.pattern.permute.xlu0 0
  %1323 = vperm.xlu0 %1322, %v1241
  %v1324 = vpop.permute.xlu0 %1323
  %1327 = vset.pattern.permute.xlu0 0
  %1328 = vperm.xlu0 %1327, %v1242
  %v1329 = vpop.permute.xlu0 %1328
  %1332 = vset.pattern.permute.xlu0 0
  %1333 = vperm.xlu0 %1332, %v1243
  %v1334 = vpop.permute.xlu0 %1333
  %1337 = vset.pattern.permute.xlu0 0
  %1338 = vperm.xlu0 %1337, %v1244
  %v1339 = vpop.permute.xlu0 %1338
  %1342 = vset.pattern.permute.xlu0 0
  %1343 = vperm.xlu0 %1342, %v1245
  %v1344 = vpop.permute.xlu0 %1343
  %1347 = vset.pattern.permute.xlu0 0
  %1348 = vperm.xlu0 %1347, %v1246
  %v1349 = vpop.permute.xlu0 %1348
  %1352 = vset.pattern.permute.xlu0 0
  %1353 = vperm.xlu0 %1352, %v1247
  %v1354 = vpop.permute.xlu0 %1353
  %1357 = vset.pattern.permute.xlu0 0
  %1358 = vperm.xlu0 %1357, %v1248
  %v1359 = vpop.permute.xlu0 %1358
  %1362 = vset.pattern.permute.xlu0 0
  %1363 = vperm.xlu0 %1362, %v1249
  %v1364 = vpop.permute.xlu0 %1363
  %1367 = vset.pattern.permute.xlu0 0
  %1368 = vperm.xlu0 %1367, %v1250
  %v1369 = vpop.permute.xlu0 %1368
  %1372 = vset.pattern.permute.xlu0 0
  %1373 = vperm.xlu0 %1372, %v1251
  %v1374 = vpop.permute.xlu0 %1373
  %1377 = vset.pattern.permute.xlu0 0
  %1378 = vperm.xlu0 %1377, %v1252
  %v1379 = vpop.permute.xlu0 %1378
  %1382 = vset.pattern.permute.xlu0 0
  %1383 = vperm.xlu0 %1382, %v1253
  %v1384 = vpop.permute.xlu0 %1383
  %1387 = vset.pattern.permute.xlu0 0
  %1388 = vperm.xlu0 %1387, %v1254
  %v1389 = vpop.permute.xlu0 %1388
  %1392 = vset.pattern.permute.xlu0 0
  %1393 = vperm.xlu0 %1392, %v1255
  %v1394 = vpop.permute.xlu0 %1393
  %1397 = vset.pattern.permute.xlu0 0
  %1398 = vperm.xlu0 %1397, %v1256
  %v1399 = vpop.permute.xlu0 %1398
  %1402 = vset.pattern.permute.xlu0 0
  %1403 = vperm.xlu0 %1402, %v1257
  %v1404 = vpop.permute.xlu0 %1403
  %1407 = vset.pattern.permute.xlu0 0
  %1408 = vperm.xlu0 %1407, %v1258
  %v1409 = vpop.permute.xlu0 %1408
  %1412 = vset.pattern.permute.xlu0 0
  %1413 = vperm.xlu0 %1412, %v1259
  %v1414 = vpop.permute.xlu0 %1413
  %1417 = vset.pattern.permute.xlu0 0
  %1418 = vperm.xlu0 %1417, %v1260
  %v1419 = vpop.permute.xlu0 %1418
  %v1453 = vunpack.c.l.b16 %v1181
  %v1454 = vunpack.c.h.b16 %v1181
  %v1455 = vunpack.c.l.b16 %v1182
  %v1456 = vunpack.c.h.b16 %v1182
  %v1457 = vunpack.c.l.b16 %v1183
  %v1458 = vunpack.c.h.b16 %v1183
  %v1459 = vunpack.c.l.b16 %v1184
  %v1460 = vunpack.c.h.b16 %v1184
  %v1461 = vunpack.c.l.b16 %v1185
  %v1462 = vunpack.c.h.b16 %v1185
  %v1463 = vunpack.c.l.b16 %v1186
  %v1464 = vunpack.c.h.b16 %v1186
  %v1465 = vunpack.c.l.b16 %v1187
  %v1466 = vunpack.c.h.b16 %v1187
  %v1467 = vunpack.c.l.b16 %v1188
  %v1468 = vunpack.c.h.b16 %v1188
  %v1469 = vunpack.c.l.b16 %v1189
  %v1470 = vunpack.c.h.b16 %v1189
  %v1471 = vunpack.c.l.b16 %v1190
  %v1472 = vunpack.c.h.b16 %v1190
  %v1473 = vunpack.c.l.b16 %v1191
  %v1474 = vunpack.c.h.b16 %v1191
  %v1475 = vunpack.c.l.b16 %v1192
  %v1476 = vunpack.c.h.b16 %v1192
  %v1477 = vunpack.c.l.b16 %v1193
  %v1478 = vunpack.c.h.b16 %v1193
  %v1479 = vunpack.c.l.b16 %v1194
  %v1480 = vunpack.c.h.b16 %v1194
  %v1481 = vunpack.c.l.b16 %v1195
  %v1482 = vunpack.c.h.b16 %v1195
  %v1483 = vunpack.c.l.b16 %v1196
  %v1484 = vunpack.c.h.b16 %v1196
  %v1485 = vunpack.c.l.b16 %v1197
  %v1486 = vunpack.c.h.b16 %v1197
  %v1487 = vunpack.c.l.b16 %v1198
  %v1488 = vunpack.c.h.b16 %v1198
  %v1489 = vunpack.c.l.b16 %v1199
  %v1490 = vunpack.c.h.b16 %v1199
  %v1491 = vunpack.c.l.b16 %v1200
  %v1492 = vunpack.c.h.b16 %v1200
  %v1493 = vunpack.c.l.b16 %v1201
  %v1494 = vunpack.c.h.b16 %v1201
  %v1495 = vunpack.c.l.b16 %v1202
  %v1496 = vunpack.c.h.b16 %v1202
  %v1497 = vunpack.c.l.b16 %v1203
  %v1498 = vunpack.c.h.b16 %v1203
  %v1499 = vunpack.c.l.b16 %v1204
  %v1500 = vunpack.c.h.b16 %v1204
  %v1501 = vunpack.c.l.b16 %v1205
  %v1502 = vunpack.c.h.b16 %v1205
  %v1503 = vunpack.c.l.b16 %v1206
  %v1504 = vunpack.c.h.b16 %v1206
  %v1505 = vunpack.c.l.b16 %v1207
  %v1506 = vunpack.c.h.b16 %v1207
  %v1507 = vunpack.c.l.b16 %v1208
  %v1508 = vunpack.c.h.b16 %v1208
  %v1509 = vunpack.c.l.b16 %v1209
  %v1510 = vunpack.c.h.b16 %v1209
  %v1511 = vunpack.c.l.b16 %v1210
  %v1512 = vunpack.c.h.b16 %v1210
  %v1513 = vunpack.c.l.b16 %v1211
  %v1514 = vunpack.c.h.b16 %v1211
  %v1515 = vunpack.c.l.b16 %v1212
  %v1516 = vunpack.c.h.b16 %v1212
  %v1517 = vpack.c.b16 %v1455, %v1453
  %v1518 = vpack.c.b16 %v1456, %v1454
  %v1519 = vpack.c.b16 %v1459, %v1457
  %v1520 = vpack.c.b16 %v1460, %v1458
  %v1521 = vpack.c.b16 %v1463, %v1461
  %v1522 = vpack.c.b16 %v1464, %v1462
  %v1523 = vpack.c.b16 %v1467, %v1465
  %v1524 = vpack.c.b16 %v1468, %v1466
  %v1525 = vpack.c.b16 %v1471, %v1469
  %v1526 = vpack.c.b16 %v1472, %v1470
  %v1527 = vpack.c.b16 %v1475, %v1473
  %v1528 = vpack.c.b16 %v1476, %v1474
  %v1529 = vpack.c.b16 %v1479, %v1477
  %v1530 = vpack.c.b16 %v1480, %v1478
  %v1531 = vpack.c.b16 %v1483, %v1481
  %v1532 = vpack.c.b16 %v1484, %v1482
  %v1533 = vpack.c.b16 %v1487, %v1485
  %v1534 = vpack.c.b16 %v1488, %v1486
  %v1535 = vpack.c.b16 %v1491, %v1489
  %v1536 = vpack.c.b16 %v1492, %v1490
  %v1537 = vpack.c.b16 %v1495, %v1493
  %v1538 = vpack.c.b16 %v1496, %v1494
  %v1539 = vpack.c.b16 %v1499, %v1497
  %v1540 = vpack.c.b16 %v1500, %v1498
  %v1541 = vpack.c.b16 %v1503, %v1501
  %v1542 = vpack.c.b16 %v1504, %v1502
  %v1543 = vpack.c.b16 %v1507, %v1505
  %v1544 = vpack.c.b16 %v1508, %v1506
  %v1545 = vpack.c.b16 %v1511, %v1509
  %v1546 = vpack.c.b16 %v1512, %v1510
  %v1547 = vpack.c.b16 %v1515, %v1513
  %v1548 = vpack.c.b16 %v1516, %v1514
  %1581 = vmatprep.subr.bf16.mxu0 0
  %1582 = vmatpush1.bf16.msra.mxu0 %v1213
  %1583 = vmatprep.subr.bf16.mxu0 0
  %1584 = vmatpush1.bf16.msra.mxu0 %v1214
  %1585 = vmatprep.subr.bf16.mxu0 0
  %1586 = vmatpush1.bf16.msra.mxu0 %v1215
  %1587 = vmatprep.subr.bf16.mxu0 0
  %1588 = vmatpush1.bf16.msra.mxu0 %v1216
  %1589 = vmatprep.subr.bf16.mxu0 0
  %1590 = vmatpush1.bf16.msra.mxu0 %v1217
  %1591 = vmatprep.subr.bf16.mxu0 0
  %1592 = vmatpush1.bf16.msra.mxu0 %v1218
  %1593 = vmatprep.subr.bf16.mxu0 0
  %1594 = vmatpush1.bf16.msra.mxu0 %v1219
  %1595 = vmatprep.subr.bf16.mxu0 0
  %1596 = vmatpush1.bf16.msra.mxu0 %v1220
  %1597 = vmatprep.subr.bf16.mxu0 0
  %1598 = vmatpush1.bf16.msra.mxu0 %v1221
  %1599 = vmatprep.subr.bf16.mxu0 0
  %1600 = vmatpush1.bf16.msra.mxu0 %v1222
  %1601 = vmatprep.subr.bf16.mxu0 0
  %1602 = vmatpush1.bf16.msra.mxu0 %v1223
  %1603 = vmatprep.subr.bf16.mxu0 0
  %1604 = vmatpush1.bf16.msra.mxu0 %v1224
  %1605 = vmatprep.subr.bf16.mxu0 0
  %1606 = vmatpush1.bf16.msra.mxu0 %v1225
  %1607 = vmatprep.subr.bf16.mxu0 0
  %1608 = vmatpush1.bf16.msra.mxu0 %v1226
  %1609 = vmatprep.subr.bf16.mxu0 0
  %1610 = vmatpush1.bf16.msra.mxu0 %v1227
  %1611 = vmatprep.subr.bf16.mxu0 0
  %1612 = vmatpush1.bf16.msra.mxu0 %v1228
  %1613 = vmatprep.mubr.bf16.mxu0 %v1518
  %1614 = vmatmul.mubr.bf16.gmra.mrb[0].mxu0 %v1517
  %v1615 = vpop.f32.mrb[0].mxu0
  %v1616 = vadd.f32 %v1264, %v1615
  %v1617 = vpop.f32.mrb[0].mxu0
  %v1618 = vpop.f32.mrb[0].mxu0
  %v1619 = vadd.f32 %v1269, %v1618
  %v1620 = vpop.f32.mrb[0].mxu0
  %1621 = vmatprep.mubr.bf16.mxu0 %v1520
  %1622 = vmatmul.mubr.bf16.gmra.mrb[0].mxu0 %v1519
  %v1623 = vpop.f32.mrb[0].mxu0
  %v1624 = vadd.f32 %v1274, %v1623
  %v1625 = vpop.f32.mrb[0].mxu0
  %v1626 = vpop.f32.mrb[0].mxu0
  %v1627 = vadd.f32 %v1279, %v1626
  %v1628 = vpop.f32.mrb[0].mxu0
  %1629 = vmatprep.mubr.bf16.mxu0 %v1522
  %1630 = vmatmul.mubr.bf16.gmra.mrb[0].mxu0 %v1521
  %v1631 = vpop.f32.mrb[0].mxu0
  %v1632 = vadd.f32 %v1284, %v1631
  %v1633 = vpop.f32.mrb[0].mxu0
  %v1634 = vpop.f32.mrb[0].mxu0
  %v1635 = vadd.f32 %v1289, %v1634
  %v1636 = vpop.f32.mrb[0].mxu0
  %1637 = vmatprep.mubr.bf16.mxu0 %v1524
  %1638 = vmatmul.mubr.bf16.gmra.mrb[0].mxu0 %v1523
  %v1639 = vpop.f32.mrb[0].mxu0
  %v1640 = vadd.f32 %v1294, %v1639
  %v1641 = vpop.f32.mrb[0].mxu0
  %v1642 = vpop.f32.mrb[0].mxu0
  %v1643 = vadd.f32 %v1299, %v1642
  %v1644 = vpop.f32.mrb[0].mxu0
  %1645 = vmatprep.mubr.bf16.mxu0 %v1526
  %1646 = vmatmul.mubr.bf16.gmra.mrb[0].mxu0 %v1525
  %v1647 = vpop.f32.mrb[0].mxu0
  %v1648 = vadd.f32 %v1304, %v1647
  %v1649 = vpop.f32.mrb[0].mxu0
  %v1650 = vpop.f32.mrb[0].mxu0
  %v1651 = vadd.f32 %v1309, %v1650
  %v1652 = vpop.f32.mrb[0].mxu0
  %1653 = vmatprep.mubr.bf16.mxu0 %v1528
  %1654 = vmatmul.mubr.bf16.gmra.mrb[0].mxu0 %v1527
  %v1655 = vpop.f32.mrb[0].mxu0
  %v1656 = vadd.f32 %v1314, %v1655
  %v1657 = vpop.f32.mrb[0].mxu0
  %v1658 = vpop.f32.mrb[0].mxu0
  %v1659 = vadd.f32 %v1319, %v1658
  %v1660 = vpop.f32.mrb[0].mxu0
  %1661 = vmatprep.mubr.bf16.mxu0 %v1530
  %1662 = vmatmul.mubr.bf16.gmra.mrb[0].mxu0 %v1529
  %v1663 = vpop.f32.mrb[0].mxu0
  %v1664 = vadd.f32 %v1324, %v1663
  %v1665 = vpop.f32.mrb[0].mxu0
  %v1666 = vpop.f32.mrb[0].mxu0
  %v1667 = vadd.f32 %v1329, %v1666
  %v1668 = vpop.f32.mrb[0].mxu0
  %1669 = vmatprep.mubr.bf16.mxu0 %v1532
  %1670 = vmatmul.mubr.bf16.gmra.mrb[0].mxu0 %v1531
  %v1671 = vpop.f32.mrb[0].mxu0
  %v1672 = vadd.f32 %v1334, %v1671
  %v1673 = vpop.f32.mrb[0].mxu0
  %v1674 = vpop.f32.mrb[0].mxu0
  %v1675 = vadd.f32 %v1339, %v1674
  %v1676 = vpop.f32.mrb[0].mxu0
  %1677 = vmatprep.mubr.bf16.mxu0 %v1534
  %1678 = vmatmul.mubr.bf16.gmra.mrb[0].mxu0 %v1533
  %v1679 = vpop.f32.mrb[0].mxu0
  %v1680 = vadd.f32 %v1344, %v1679
  %v1681 = vpop.f32.mrb[0].mxu0
  %v1682 = vpop.f32.mrb[0].mxu0
  %v1683 = vadd.f32 %v1349, %v1682
  %v1684 = vpop.f32.mrb[0].mxu0
  %1685 = vmatprep.mubr.bf16.mxu0 %v1536
  %1686 = vmatmul.mubr.bf16.gmra.mrb[0].mxu0 %v1535
  %v1687 = vpop.f32.mrb[0].mxu0
  %v1688 = vadd.f32 %v1354, %v1687
  %v1689 = vpop.f32.mrb[0].mxu0
  %v1690 = vpop.f32.mrb[0].mxu0
  %v1691 = vadd.f32 %v1359, %v1690
  %v1692 = vpop.f32.mrb[0].mxu0
  %1693 = vmatprep.mubr.bf16.mxu0 %v1538
  %1694 = vmatmul.mubr.bf16.gmra.mrb[0].mxu0 %v1537
  %v1695 = vpop.f32.mrb[0].mxu0
  %v1696 = vadd.f32 %v1364, %v1695
  %v1697 = vpop.f32.mrb[0].mxu0
  %v1698 = vpop.f32.mrb[0].mxu0
  %v1699 = vadd.f32 %v1369, %v1698
  %v1700 = vpop.f32.mrb[0].mxu0
  %1701 = vmatprep.mubr.bf16.mxu0 %v1540
  %1702 = vmatmul.mubr.bf16.gmra.mrb[0].mxu0 %v1539
  %v1703 = vpop.f32.mrb[0].mxu0
  %v1704 = vadd.f32 %v1374, %v1703
  %v1705 = vpop.f32.mrb[0].mxu0
  %v1706 = vpop.f32.mrb[0].mxu0
  %v1707 = vadd.f32 %v1379, %v1706
  %v1708 = vpop.f32.mrb[0].mxu0
  %1709 = vmatprep.mubr.bf16.mxu0 %v1542
  %1710 = vmatmul.mubr.bf16.gmra.mrb[0].mxu0 %v1541
  %v1711 = vpop.f32.mrb[0].mxu0
  %v1712 = vadd.f32 %v1384, %v1711
  %v1713 = vpop.f32.mrb[0].mxu0
  %v1714 = vpop.f32.mrb[0].mxu0
  %v1715 = vadd.f32 %v1389, %v1714
  %v1716 = vpop.f32.mrb[0].mxu0
  %1717 = vmatprep.mubr.bf16.mxu0 %v1544
  %1718 = vmatmul.mubr.bf16.gmra.mrb[0].mxu0 %v1543
  %v1719 = vpop.f32.mrb[0].mxu0
  %v1720 = vadd.f32 %v1394, %v1719
  %v1721 = vpop.f32.mrb[0].mxu0
  %v1722 = vpop.f32.mrb[0].mxu0
  %v1723 = vadd.f32 %v1399, %v1722
  %v1724 = vpop.f32.mrb[0].mxu0
  %1725 = vmatprep.mubr.bf16.mxu0 %v1546
  %1726 = vmatmul.mubr.bf16.gmra.mrb[0].mxu0 %v1545
  %v1727 = vpop.f32.mrb[0].mxu0
  %v1728 = vadd.f32 %v1404, %v1727
  %v1729 = vpop.f32.mrb[0].mxu0
  %v1730 = vpop.f32.mrb[0].mxu0
  %v1731 = vadd.f32 %v1409, %v1730
  %v1732 = vpop.f32.mrb[0].mxu0
  %1733 = vmatprep.mubr.bf16.mxu0 %v1548
  %1734 = vmatmul.mubr.bf16.gmra.mrb[0].mxu0 %v1547
  %v1735 = vpop.f32.mrb[0].mxu0
  %v1736 = vadd.f32 %v1414, %v1735
  %v1737 = vpop.f32.mrb[0].mxu0
  %v1738 = vpop.f32.mrb[0].mxu0
  %v1739 = vadd.f32 %v1419, %v1738
  %v1740 = vpop.f32.mrb[0].mxu0
  %1741 = vdwg.mxu0
  %v1742 = vmax.f32 %v1616, 0.0
  %v1743 = vmax.f32 %v1619, 0.0
  %v1744 = vmax.f32 %v1624, 0.0
  %v1745 = vmax.f32 %v1627, 0.0
  %v1746 = vmax.f32 %v1632, 0.0
  %v1747 = vmax.f32 %v1635, 0.0
  %v1748 = vmax.f32 %v1640, 0.0
  %v1749 = vmax.f32 %v1643, 0.0
  %v1750 = vmax.f32 %v1648, 0.0
  %v1751 = vmax.f32 %v1651, 0.0
  %v1752 = vmax.f32 %v1656, 0.0
  %v1753 = vmax.f32 %v1659, 0.0
  %v1754 = vmax.f32 %v1664, 0.0
  %v1755 = vmax.f32 %v1667, 0.0
  %v1756 = vmax.f32 %v1672, 0.0
  %v1757 = vmax.f32 %v1675, 0.0
  %v1758 = vmax.f32 %v1680, 0.0
  %v1759 = vmax.f32 %v1683, 0.0
  %v1760 = vmax.f32 %v1688, 0.0
  %v1761 = vmax.f32 %v1691, 0.0
  %v1762 = vmax.f32 %v1696, 0.0
  %v1763 = vmax.f32 %v1699, 0.0
  %v1764 = vmax.f32 %v1704, 0.0
  %v1765 = vmax.f32 %v1707, 0.0
  %v1766 = vmax.f32 %v1712, 0.0
  %v1767 = vmax.f32 %v1715, 0.0
  %v1768 = vmax.f32 %v1720, 0.0
  %v1769 = vmax.f32 %v1723, 0.0
  %v1770 = vmax.f32 %v1728, 0.0
  %v1771 = vmax.f32 %v1731, 0.0
  %v1772 = vmax.f32 %v1736, 0.0
  %v1773 = vmax.f32 %v1739, 0.0
  %v1774 = vld [vmem:[%s7] sm:$0xff]
  %v1775 = vld [vmem:[%s7 + $0x8] sm:$0xff]
  %v1776 = vld [vmem:[%s7 + $0x10] sm:$0xff]
  %v1777 = vld [vmem:[%s7 + $0x18] sm:$0xff]
  %v1778 = vld [vmem:[%s7 + $0x20] sm:$0xff]
  %v1779 = vld [vmem:[%s7 + $0x28] sm:$0xff]
  %v1780 = vld [vmem:[%s7 + $0x30] sm:$0xff]
  %v1781 = vld [vmem:[%s7 + $0x38] sm:$0xff]
  %v1782 = vld [vmem:[%s7 + $0x40] sm:$0xff]
  %v1783 = vld [vmem:[%s7 + $0x48] sm:$0xff]
  %v1784 = vld [vmem:[%s7 + $0x50] sm:$0xff]
  %v1785 = vld [vmem:[%s7 + $0x58] sm:$0xff]
  %v1786 = vld [vmem:[%s7 + $0x60] sm:$0xff]
  %v1787 = vld [vmem:[%s7 + $0x68] sm:$0xff]
  %v1788 = vld [vmem:[%s7 + $0x70] sm:$0xff]
  %v1789 = vld [vmem:[%s7 + $0x78] sm:$0xff]
  %v1790 = vld [vmem:[%s7 + $0x80] sm:$0xff]
  %v1791 = vld [vmem:[%s7 + $0x88] sm:$0xff]
  %v1792 = vld [vmem:[%s7 + $0x90] sm:$0xff]
  %v1793 = vld [vmem:[%s7 + $0x98] sm:$0xff]
  %v1794 = vld [vmem:[%s7 + $0xa0] sm:$0xff]
  %v1795 = vld [vmem:[%s7 + $0xa8] sm:$0xff]
  %v1796 = vld [vmem:[%s7 + $0xb0] sm:$0xff]
  %v1797 = vld [vmem:[%s7 + $0xb8] sm:$0xff]
  %v1798 = vld [vmem:[%s7 + $0xc0] sm:$0xff]
  %v1799 = vld [vmem:[%s7 + $0xc8] sm:$0xff]
  %v1800 = vld [vmem:[%s7 + $0xd0] sm:$0xff]
  %v1801 = vld [vmem:[%s7 + $0xd8] sm:$0xff]
  %v1802 = vld [vmem:[%s7 + $0xe0] sm:$0xff]
  %v1803 = vld [vmem:[%s7 + $0xe8] sm:$0xff]
  %v1804 = vld [vmem:[%s7 + $0xf0] sm:$0xff]
  %v1805 = vld [vmem:[%s7 + $0xf8] sm:$0xff]
  %1807 = vset.pattern.permute.xlu0 0
  %1808 = vperm.xlu0 %1807, %v1774
  %v1809 = vpop.permute.xlu0 %1808
  %1812 = vset.pattern.permute.xlu0 0
  %1813 = vperm.xlu0 %1812, %v1775
  %v1814 = vpop.permute.xlu0 %1813
  %1817 = vset.pattern.permute.xlu0 0
  %1818 = vperm.xlu0 %1817, %v1776
  %v1819 = vpop.permute.xlu0 %1818
  %1822 = vset.pattern.permute.xlu0 0
  %1823 = vperm.xlu0 %1822, %v1777
  %v1824 = vpop.permute.xlu0 %1823
  %1827 = vset.pattern.permute.xlu0 0
  %1828 = vperm.xlu0 %1827, %v1778
  %v1829 = vpop.permute.xlu0 %1828
  %1832 = vset.pattern.permute.xlu0 0
  %1833 = vperm.xlu0 %1832, %v1779
  %v1834 = vpop.permute.xlu0 %1833
  %1837 = vset.pattern.permute.xlu0 0
  %1838 = vperm.xlu0 %1837, %v1780
  %v1839 = vpop.permute.xlu0 %1838
  %1842 = vset.pattern.permute.xlu0 0
  %1843 = vperm.xlu0 %1842, %v1781
  %v1844 = vpop.permute.xlu0 %1843
  %1847 = vset.pattern.permute.xlu0 0
  %1848 = vperm.xlu0 %1847, %v1782
  %v1849 = vpop.permute.xlu0 %1848
  %1852 = vset.pattern.permute.xlu0 0
  %1853 = vperm.xlu0 %1852, %v1783
  %v1854 = vpop.permute.xlu0 %1853
  %1857 = vset.pattern.permute.xlu0 0
  %1858 = vperm.xlu0 %1857, %v1784
  %v1859 = vpop.permute.xlu0 %1858
  %1862 = vset.pattern.permute.xlu0 0
  %1863 = vperm.xlu0 %1862, %v1785
  %v1864 = vpop.permute.xlu0 %1863
  %1867 = vset.pattern.permute.xlu0 0
  %1868 = vperm.xlu0 %1867, %v1786
  %v1869 = vpop.permute.xlu0 %1868
  %1872 = vset.pattern.permute.xlu0 0
  %1873 = vperm.xlu0 %1872, %v1787
  %v1874 = vpop.permute.xlu0 %1873
  %1877 = vset.pattern.permute.xlu0 0
  %1878 = vperm.xlu0 %1877, %v1788
  %v1879 = vpop.permute.xlu0 %1878
  %1882 = vset.pattern.permute.xlu0 0
  %1883 = vperm.xlu0 %1882, %v1789
  %v1884 = vpop.permute.xlu0 %1883
  %1887 = vset.pattern.permute.xlu0 0
  %1888 = vperm.xlu0 %1887, %v1790
  %v1889 = vpop.permute.xlu0 %1888
  %1892 = vset.pattern.permute.xlu0 0
  %1893 = vperm.xlu0 %1892, %v1791
  %v1894 = vpop.permute.xlu0 %1893
  %1897 = vset.pattern.permute.xlu0 0
  %1898 = vperm.xlu0 %1897, %v1792
  %v1899 = vpop.permute.xlu0 %1898
  %1902 = vset.pattern.permute.xlu0 0
  %1903 = vperm.xlu0 %1902, %v1793
  %v1904 = vpop.permute.xlu0 %1903
  %1907 = vset.pattern.permute.xlu0 0
  %1908 = vperm.xlu0 %1907, %v1794
  %v1909 = vpop.permute.xlu0 %1908
  %1912 = vset.pattern.permute.xlu0 0
  %1913 = vperm.xlu0 %1912, %v1795
  %v1914 = vpop.permute.xlu0 %1913
  %1917 = vset.pattern.permute.xlu0 0
  %1918 = vperm.xlu0 %1917, %v1796
  %v1919 = vpop.permute.xlu0 %1918
  %1922 = vset.pattern.permute.xlu0 0
  %1923 = vperm.xlu0 %1922, %v1797
  %v1924 = vpop.permute.xlu0 %1923
  %1927 = vset.pattern.permute.xlu0 0
  %1928 = vperm.xlu0 %1927, %v1798
  %v1929 = vpop.permute.xlu0 %1928
  %1932 = vset.pattern.permute.xlu0 0
  %1933 = vperm.xlu0 %1932, %v1799
  %v1934 = vpop.permute.xlu0 %1933
  %1937 = vset.pattern.permute.xlu0 0
  %1938 = vperm.xlu0 %1937, %v1800
  %v1939 = vpop.permute.xlu0 %1938
  %1942 = vset.pattern.permute.xlu0 0
  %1943 = vperm.xlu0 %1942, %v1801
  %v1944 = vpop.permute.xlu0 %1943
  %1947 = vset.pattern.permute.xlu0 0
  %1948 = vperm.xlu0 %1947, %v1802
  %v1949 = vpop.permute.xlu0 %1948
  %1952 = vset.pattern.permute.xlu0 0
  %1953 = vperm.xlu0 %1952, %v1803
  %v1954 = vpop.permute.xlu0 %1953
  %1957 = vset.pattern.permute.xlu0 0
  %1958 = vperm.xlu0 %1957, %v1804
  %v1959 = vpop.permute.xlu0 %1958
  %1962 = vset.pattern.permute.xlu0 0
  %1963 = vperm.xlu0 %1962, %v1805
  %v1964 = vpop.permute.xlu0 %1963
  %v1966 = vmul.f32 %v1742, %v1809
  %v1967 = vmul.f32 %v1743, %v1814
  %v1968 = vmul.f32 %v1744, %v1819
  %v1969 = vmul.f32 %v1745, %v1824
  %v1970 = vmul.f32 %v1746, %v1829
  %v1971 = vmul.f32 %v1747, %v1834
  %v1972 = vmul.f32 %v1748, %v1839
  %v1973 = vmul.f32 %v1749, %v1844
  %v1974 = vmul.f32 %v1750, %v1849
  %v1975 = vmul.f32 %v1751, %v1854
  %v1976 = vmul.f32 %v1752, %v1859
  %v1977 = vmul.f32 %v1753, %v1864
  %v1978 = vmul.f32 %v1754, %v1869
  %v1979 = vmul.f32 %v1755, %v1874
  %v1980 = vmul.f32 %v1756, %v1879
  %v1981 = vmul.f32 %v1757, %v1884
  %v1982 = vmul.f32 %v1758, %v1889
  %v1983 = vmul.f32 %v1759, %v1894
  %v1984 = vmul.f32 %v1760, %v1899
  %v1985 = vmul.f32 %v1761, %v1904
  %v1986 = vmul.f32 %v1762, %v1909
  %v1987 = vmul.f32 %v1763, %v1914
  %v1988 = vmul.f32 %v1764, %v1919
  %v1989 = vmul.f32 %v1765, %v1924
  %v1990 = vmul.f32 %v1766, %v1929
  %v1991 = vmul.f32 %v1767, %v1934
  %v1992 = vmul.f32 %v1768, %v1939
  %v1993 = vmul.f32 %v1769, %v1944
  %v1994 = vmul.f32 %v1770, %v1949
  %v1995 = vmul.f32 %v1771, %v1954
  %v1996 = vmul.f32 %v1772, %v1959
  %v1997 = vmul.f32 %v1773, %v1964
  %v1998 = vadd.f32 %v1966, %v1967
  %v1999 = vadd.f32 %v1998, %v1968
  %v2000 = vadd.f32 %v1999, %v1969
  %v2001 = vadd.f32 %v2000, %v1970
  %v2002 = vadd.f32 %v2001, %v1971
  %v2003 = vadd.f32 %v2002, %v1972
  %v2004 = vadd.f32 %v2003, %v1973
  %v2005 = vadd.f32 %v2004, %v1974
  %v2006 = vadd.f32 %v2005, %v1975
  %v2007 = vadd.f32 %v2006, %v1976
  %v2008 = vadd.f32 %v2007, %v1977
  %v2009 = vadd.f32 %v2008, %v1978
  %v2010 = vadd.f32 %v2009, %v1979
  %v2011 = vadd.f32 %v2010, %v1980
  %v2012 = vadd.f32 %v2011, %v1981
  %v2013 = vadd.f32 %v2012, %v1982
  %v2014 = vadd.f32 %v2013, %v1983
  %v2015 = vadd.f32 %v2014, %v1984
  %v2016 = vadd.f32 %v2015, %v1985
  %v2017 = vadd.f32 %v2016, %v1986
  %v2018 = vadd.f32 %v2017, %v1987
  %v2019 = vadd.f32 %v2018, %v1988
  %v2020 = vadd.f32 %v2019, %v1989
  %v2021 = vadd.f32 %v2020, %v1990
  %v2022 = vadd.f32 %v2021, %v1991
  %v2023 = vadd.f32 %v2022, %v1992
  %v2024 = vadd.f32 %v2023, %v1993
  %v2025 = vadd.f32 %v2024, %v1994
  %v2026 = vadd.f32 %v2025, %v1995
  %v2027 = vadd.f32 %v2026, %v1996
  %v2028 = vadd.f32 %v2027, %v1997
  %v2029 = vrot.slane %v2028, 4
  %v2030 = vadd.f32 %v2028, %v2029
  %v2031 = vrot.slane %v2030, 2
  %v2032 = vadd.f32 %v2030, %v2031
  %v2033 = vrot.slane %v2032, 1
  %v2034 = vadd.f32 %v2032, %v2033
  %s2035 = sld [smem:[#allocation2]]
  %v2036 = vstv %s2035
  %v2037 = vadd.f32 %v2034, %v2036
  %2038 = vst [vmem:[%s9] sm:$0x1] %v2037
  // Predicated region
  $region38: #{qnetwork_forward.1} parent=0 // pred_check
    _
  $region39: #{qnetwork_forward.1} parent=0 // pred_check_branch
    %2040 = sbr.rel (0) target = $region41
  $region40: #{qnetwork_forward.1} parent=0 // pred_region
    _
  $region41: #{qnetwork_forward.1} parent=0 // pred_fallthru
    _
  // Predicated region
  $region42: #{qnetwork_forward.1} parent=0 // pred_check
    _
  $region43: #{qnetwork_forward.1} parent=0 // pred_check_branch
    %2042 = sbr.rel (0) target = $region45
  $region44: #{qnetwork_forward.1} parent=0 // pred_region
    _
  $region45: #{qnetwork_forward.1} parent=0 // pred_fallthru
    _

</llo_original>
